<compile_context>
chip_gen: v6e
topology: v6e:2x2x1
jax: 0.10.0
libtpu: 0.0.40
codegen_flags: <defaults>
</compile_context>

<pallas_src>
import jax
import jax.numpy as jnp
from jax.experimental import pallas as pl
from jax.experimental.pallas import tpu as pltpu

F_DIM = 16        # EEGNet feature channels (module default feat_dim=16)
K1, PAD1 = 25, 12 # conv1 kernel / padding
K2, PAD2 = 3, 1   # depthwise / separable-depthwise kernel / padding
LPAD = 128        # lane-aligned left pad inside the shift scratch


def _elu(v):
    # nn.ELU(alpha=1.0); exp(min(v, 0)) - 1 keeps the EUP exp argument in range.
    return jnp.where(v > 0, v, jnp.exp(jnp.minimum(v, 0.0)) - 1.0)


def eegnet1d_kernel(x_ref, w1_ref, dw_ref, sdw_ref, pw_ref, b_ref,
                    out_ref, pad_ref):
    # x_ref   : (1, 1, T + 2*PAD1) one sample, time pre-padded for conv1
    # w1_ref  : (25, 16, 1) conv1 weights (BN1 scale folded), taps-major
    # dw_ref  : (3, 16, 1)  depthwise weights (BN2 scale folded)
    # sdw_ref : (3, 16, 1)  separable depthwise weights
    # pw_ref  : (16, 16)    separable pointwise weights (BN3 scale folded)
    # b_ref   : (3, 16, 1)  folded BN shifts (bn1, bn2, bn3)
    # out_ref : (1, 16, 1)  pooled features for this sample
    # pad_ref : (16, LPAD + T + LPAD) VMEM scratch for zero-padded time shifts
    tp = x_ref.shape[-1]
    t = tp - 2 * PAD1
    f = F_DIM

    # ---- conv1: Conv1d(1, 16, k=25, pad=12, bias=False) + BN1 (folded) + ELU ----
    acc = jnp.zeros((f, t), jnp.float32)
    for k in range(K1):                                   # tap-shifted FMA (VPU)
        acc = acc + w1_ref[k] * x_ref[0, :, pl.ds(k, t)]  # (16,1) * (1,T)
    a = _elu(acc + b_ref[0])

    # Zero the shift scratch once per sample; only the aligned middle region
    # is overwritten below, so the boundary columns stay zero.
    pad_ref[...] = jnp.zeros_like(pad_ref)

    # ---- depthwise Conv1d(16,16,k=3,pad=1,groups=16) + BN2 (folded) + ELU ----
    pad_ref[:, pl.ds(LPAD, t)] = a                        # aligned store
    acc = jnp.zeros((f, t), jnp.float32)
    for k in range(K2):
        acc = acc + dw_ref[k] * pad_ref[:, pl.ds(LPAD - PAD2 + k, t)]
    a = _elu(acc + b_ref[1])

    # ---- separable: depthwise k=3 pad=1 then pointwise 16->16 + BN3 + ELU ----
    pad_ref[:, pl.ds(LPAD, t)] = a
    acc = jnp.zeros((f, t), jnp.float32)
    for k in range(K2):
        acc = acc + sdw_ref[k] * pad_ref[:, pl.ds(LPAD - PAD2 + k, t)]
    a = _elu(jnp.dot(pw_ref[...], acc, preferred_element_type=jnp.float32)
             + b_ref[2])

    # ---- AvgPool1d(4) + Dropout(eval) + adaptive_avg_pool1d(.,1)
    #      == mean over the first 4*(T//4) time samples ----
    tc = (t // 4) * 4
    out_ref[0] = jnp.mean(a[:, :tc], axis=-1, keepdims=True)


def eegnet1d_forward(x, params):
    """x: (B, 1, T) float32 -> (B, 16) features, matching EEGNet1D.forward (eval)."""
    B, cin, T = x.shape
    assert cin == 1
    x_pad = jnp.pad(x.astype(jnp.float32), ((0, 0), (0, 0), (PAD1, PAD1)))
    Tp = T + 2 * PAD1
    consts = [params['w1'], params['dw'], params['sdw'], params['pw'], params['bias']]

    def const_spec(a):
        nd = a.ndim
        return pl.BlockSpec(a.shape, lambda i, _nd=nd: (0,) * _nd)

    out = pl.pallas_call(
        eegnet1d_kernel,
        out_shape=jax.ShapeDtypeStruct((B, F_DIM, 1), jnp.float32),
        grid_spec=pltpu.PrefetchScalarGridSpec(
            num_scalar_prefetch=0,
            grid=(B,),
            in_specs=[pl.BlockSpec((1, 1, Tp), lambda i: (i, 0, 0))]
                     + [const_spec(a) for a in consts],
            out_specs=pl.BlockSpec((1, F_DIM, 1), lambda i: (i, 0, 0)),
            scratch_shapes=[pltpu.VMEM((F_DIM, LPAD + T + LPAD), jnp.float32)],
        ),
        compiler_params=pltpu.CompilerParams(dimension_semantics=("parallel",)),
    )(x_pad, *consts)
    return out[..., 0]     # (B, 16)


def init_params(key, feat_dim=F_DIM):
    """Random weights + random eval-mode BatchNorm stats, folded for the kernel."""
    ks = iter(jax.random.split(key, 32))

    def nrm(shape, s=0.2):
        return s * jax.random.normal(next(ks), shape, dtype=jnp.float32)

    def bn(n):  # fold eval-mode BatchNorm into per-channel scale / shift (eps=1e-5)
        gamma = 1.0 + 0.1 * jax.random.normal(next(ks), (n,), dtype=jnp.float32)
        beta = 0.1 * jax.random.normal(next(ks), (n,), dtype=jnp.float32)
        mean = 0.1 * jax.random.normal(next(ks), (n,), dtype=jnp.float32)
        var = jax.random.uniform(next(ks), (n,), jnp.float32, minval=0.5, maxval=1.5)
        scale = gamma * jax.lax.rsqrt(var + 1e-5)
        shift = beta - mean * scale
        return scale, shift

    f = feat_dim
    w1 = nrm((f, K1))      # Conv1d(1, 16, 25) weight[:, 0, :]
    dw = nrm((f, K2))      # depthwise Conv1d weight[:, 0, :]
    sdw = nrm((f, K2))     # separable depthwise weight[:, 0, :]
    pw = nrm((f, f))       # separable pointwise weight[:, :, 0]
    s1, b1 = bn(f)
    s2, b2 = bn(f)
    s3, b3 = bn(f)

    p = {}
    # BN scales folded into the preceding (bias-free) conv weights; taps-major layout
    p['w1'] = jnp.transpose(w1 * s1[:, None])[:, :, None]   # (25, 16, 1)
    p['dw'] = jnp.transpose(dw * s2[:, None])[:, :, None]   # (3, 16, 1)
    p['sdw'] = jnp.transpose(sdw)[:, :, None]                # (3, 16, 1)
    p['pw'] = pw * s3[:, None]                               # (16, 16) BN3 folded into rows
    p['bias'] = jnp.stack([b1, b2, b3])[:, :, None]          # (3, 16, 1) remaining BN shifts
    return p


if __name__ == "__main__":
    B, T = 2, 128                      # small shapes; T multiple of 4 like real EEG windows
    key = jax.random.PRNGKey(0)
    kx, kp = jax.random.split(key)
    x = jax.random.normal(kx, (B, 1, T), dtype=jnp.float32)

    params = init_params(kp)
    feats = eegnet1d_forward(x, params)
    feats = jax.block_until_ready(feats)
    assert feats.shape == (B, F_DIM)
    assert bool(jnp.all(jnp.isfinite(feats)))
    print("KERNEL_OK")
</pallas_src>

<mosaic_0001>
module attributes {stable_mosaic.version = 11 : i64} {
  func.func @eegnet1d_kernel(%arg0: i32, %arg1: memref<1x1x152xf32, #tpu.memory_space<vmem>>, %arg2: memref<25x16x1xf32, #tpu.memory_space<vmem>>, %arg3: memref<3x16x1xf32, #tpu.memory_space<vmem>>, %arg4: memref<3x16x1xf32, #tpu.memory_space<vmem>>, %arg5: memref<16x16xf32, #tpu.memory_space<vmem>>, %arg6: memref<3x16x1xf32, #tpu.memory_space<vmem>>, %arg7: memref<1x16x1xf32, #tpu.memory_space<vmem>>, %arg8: memref<16x384xf32, #tpu.memory_space<vmem>>) attributes {dimension_semantics = [#tpu.dimension_semantics<parallel>], iteration_bounds = array<i64: 2>, scalar_prefetch = 0 : i64, scratch_operands = 1 : i64, tpu.core_type = #tpu.core_type<tc>, window_params = [{transform_indices = @transform_0, window_bounds = array<i64: 1, 1, 152>}, {pipeline_mode = #tpu.pipeline_mode<synchronous>, transform_indices = @transform_1, window_bounds = array<i64: 25, 16, 1>}, {pipeline_mode = #tpu.pipeline_mode<synchronous>, transform_indices = @transform_2, window_bounds = array<i64: 3, 16, 1>}, {pipeline_mode = #tpu.pipeline_mode<synchronous>, transform_indices = @transform_3, window_bounds = array<i64: 3, 16, 1>}, {pipeline_mode = #tpu.pipeline_mode<synchronous>, transform_indices = @transform_4, window_bounds = array<i64: 16, 16>}, {pipeline_mode = #tpu.pipeline_mode<synchronous>, transform_indices = @transform_5, window_bounds = array<i64: 3, 16, 1>}, {transform_indices = @transform_6, window_bounds = array<i64: 1, 16, 1>}]} {
    %cst = arith.constant 0.000000e+00 : f32
    %0 = vector.broadcast %cst : f32 to vector<16x128xf32>
    %c0 = arith.constant 0 : index
    %c0_0 = arith.constant 0 : index
    %c0_1 = arith.constant 0 : index
    %1 = vector.load %arg2[%c0, %c0_0, %c0_1] : memref<25x16x1xf32, #tpu.memory_space<vmem>>, vector<1x16x1xf32>
    %2 = vector.shape_cast %1 : vector<1x16x1xf32> to vector<16x1xf32>
    %c0_2 = arith.constant 0 : index
    %c0_3 = arith.constant 0 : index
    %c0_4 = arith.constant 0 : index
    %3 = vector.load %arg1[%c0_2, %c0_3, %c0_4] : memref<1x1x152xf32, #tpu.memory_space<vmem>>, vector<1x1x128xf32>
    %4 = vector.shape_cast %3 : vector<1x1x128xf32> to vector<1x128xf32>
    %5 = vector.broadcast %2 : vector<16x1xf32> to vector<16x128xf32>
    %6 = vector.broadcast %4 : vector<1x128xf32> to vector<16x128xf32>
    %7 = arith.mulf %5, %6 : vector<16x128xf32>
    %8 = arith.addf %0, %7 : vector<16x128xf32>
    %c1 = arith.constant 1 : index
    %c0_5 = arith.constant 0 : index
    %c0_6 = arith.constant 0 : index
    %9 = vector.load %arg2[%c1, %c0_5, %c0_6] : memref<25x16x1xf32, #tpu.memory_space<vmem>>, vector<1x16x1xf32>
    %10 = vector.shape_cast %9 : vector<1x16x1xf32> to vector<16x1xf32>
    %c0_7 = arith.constant 0 : index
    %c0_8 = arith.constant 0 : index
    %c1_9 = arith.constant 1 : index
    %11 = vector.load %arg1[%c0_7, %c0_8, %c1_9] : memref<1x1x152xf32, #tpu.memory_space<vmem>>, vector<1x1x128xf32>
    %12 = vector.shape_cast %11 : vector<1x1x128xf32> to vector<1x128xf32>
    %13 = vector.broadcast %10 : vector<16x1xf32> to vector<16x128xf32>
    %14 = vector.broadcast %12 : vector<1x128xf32> to vector<16x128xf32>
    %15 = arith.mulf %13, %14 : vector<16x128xf32>
    %16 = arith.addf %8, %15 : vector<16x128xf32>
    %c2 = arith.constant 2 : index
    %c0_10 = arith.constant 0 : index
    %c0_11 = arith.constant 0 : index
    %17 = vector.load %arg2[%c2, %c0_10, %c0_11] : memref<25x16x1xf32, #tpu.memory_space<vmem>>, vector<1x16x1xf32>
    %18 = vector.shape_cast %17 : vector<1x16x1xf32> to vector<16x1xf32>
    %c0_12 = arith.constant 0 : index
    %c0_13 = arith.constant 0 : index
    %c2_14 = arith.constant 2 : index
    %19 = vector.load %arg1[%c0_12, %c0_13, %c2_14] : memref<1x1x152xf32, #tpu.memory_space<vmem>>, vector<1x1x128xf32>
    %20 = vector.shape_cast %19 : vector<1x1x128xf32> to vector<1x128xf32>
    %21 = vector.broadcast %18 : vector<16x1xf32> to vector<16x128xf32>
    %22 = vector.broadcast %20 : vector<1x128xf32> to vector<16x128xf32>
    %23 = arith.mulf %21, %22 : vector<16x128xf32>
    %24 = arith.addf %16, %23 : vector<16x128xf32>
    %c3 = arith.constant 3 : index
    %c0_15 = arith.constant 0 : index
    %c0_16 = arith.constant 0 : index
    %25 = vector.load %arg2[%c3, %c0_15, %c0_16] : memref<25x16x1xf32, #tpu.memory_space<vmem>>, vector<1x16x1xf32>
    %26 = vector.shape_cast %25 : vector<1x16x1xf32> to vector<16x1xf32>
    %c0_17 = arith.constant 0 : index
    %c0_18 = arith.constant 0 : index
    %c3_19 = arith.constant 3 : index
    %27 = vector.load %arg1[%c0_17, %c0_18, %c3_19] : memref<1x1x152xf32, #tpu.memory_space<vmem>>, vector<1x1x128xf32>
    %28 = vector.shape_cast %27 : vector<1x1x128xf32> to vector<1x128xf32>
    %29 = vector.broadcast %26 : vector<16x1xf32> to vector<16x128xf32>
    %30 = vector.broadcast %28 : vector<1x128xf32> to vector<16x128xf32>
    %31 = arith.mulf %29, %30 : vector<16x128xf32>
    %32 = arith.addf %24, %31 : vector<16x128xf32>
    %c4 = arith.constant 4 : index
    %c0_20 = arith.constant 0 : index
    %c0_21 = arith.constant 0 : index
    %33 = vector.load %arg2[%c4, %c0_20, %c0_21] : memref<25x16x1xf32, #tpu.memory_space<vmem>>, vector<1x16x1xf32>
    %34 = vector.shape_cast %33 : vector<1x16x1xf32> to vector<16x1xf32>
    %c0_22 = arith.constant 0 : index
    %c0_23 = arith.constant 0 : index
    %c4_24 = arith.constant 4 : index
    %35 = vector.load %arg1[%c0_22, %c0_23, %c4_24] : memref<1x1x152xf32, #tpu.memory_space<vmem>>, vector<1x1x128xf32>
    %36 = vector.shape_cast %35 : vector<1x1x128xf32> to vector<1x128xf32>
    %37 = vector.broadcast %34 : vector<16x1xf32> to vector<16x128xf32>
    %38 = vector.broadcast %36 : vector<1x128xf32> to vector<16x128xf32>
    %39 = arith.mulf %37, %38 : vector<16x128xf32>
    %40 = arith.addf %32, %39 : vector<16x128xf32>
    %c5 = arith.constant 5 : index
    %c0_25 = arith.constant 0 : index
    %c0_26 = arith.constant 0 : index
    %41 = vector.load %arg2[%c5, %c0_25, %c0_26] : memref<25x16x1xf32, #tpu.memory_space<vmem>>, vector<1x16x1xf32>
    %42 = vector.shape_cast %41 : vector<1x16x1xf32> to vector<16x1xf32>
    %c0_27 = arith.constant 0 : index
    %c0_28 = arith.constant 0 : index
    %c5_29 = arith.constant 5 : index
    %43 = vector.load %arg1[%c0_27, %c0_28, %c5_29] : memref<1x1x152xf32, #tpu.memory_space<vmem>>, vector<1x1x128xf32>
    %44 = vector.shape_cast %43 : vector<1x1x128xf32> to vector<1x128xf32>
    %45 = vector.broadcast %42 : vector<16x1xf32> to vector<16x128xf32>
    %46 = vector.broadcast %44 : vector<1x128xf32> to vector<16x128xf32>
    %47 = arith.mulf %45, %46 : vector<16x128xf32>
    %48 = arith.addf %40, %47 : vector<16x128xf32>
    %c6 = arith.constant 6 : index
    %c0_30 = arith.constant 0 : index
    %c0_31 = arith.constant 0 : index
    %49 = vector.load %arg2[%c6, %c0_30, %c0_31] : memref<25x16x1xf32, #tpu.memory_space<vmem>>, vector<1x16x1xf32>
    %50 = vector.shape_cast %49 : vector<1x16x1xf32> to vector<16x1xf32>
    %c0_32 = arith.constant 0 : index
    %c0_33 = arith.constant 0 : index
    %c6_34 = arith.constant 6 : index
    %51 = vector.load %arg1[%c0_32, %c0_33, %c6_34] : memref<1x1x152xf32, #tpu.memory_space<vmem>>, vector<1x1x128xf32>
    %52 = vector.shape_cast %51 : vector<1x1x128xf32> to vector<1x128xf32>
    %53 = vector.broadcast %50 : vector<16x1xf32> to vector<16x128xf32>
    %54 = vector.broadcast %52 : vector<1x128xf32> to vector<16x128xf32>
    %55 = arith.mulf %53, %54 : vector<16x128xf32>
    %56 = arith.addf %48, %55 : vector<16x128xf32>
    %c7 = arith.constant 7 : index
    %c0_35 = arith.constant 0 : index
    %c0_36 = arith.constant 0 : index
    %57 = vector.load %arg2[%c7, %c0_35, %c0_36] : memref<25x16x1xf32, #tpu.memory_space<vmem>>, vector<1x16x1xf32>
    %58 = vector.shape_cast %57 : vector<1x16x1xf32> to vector<16x1xf32>
    %c0_37 = arith.constant 0 : index
    %c0_38 = arith.constant 0 : index
    %c7_39 = arith.constant 7 : index
    %59 = vector.load %arg1[%c0_37, %c0_38, %c7_39] : memref<1x1x152xf32, #tpu.memory_space<vmem>>, vector<1x1x128xf32>
    %60 = vector.shape_cast %59 : vector<1x1x128xf32> to vector<1x128xf32>
    %61 = vector.broadcast %58 : vector<16x1xf32> to vector<16x128xf32>
    %62 = vector.broadcast %60 : vector<1x128xf32> to vector<16x128xf32>
    %63 = arith.mulf %61, %62 : vector<16x128xf32>
    %64 = arith.addf %56, %63 : vector<16x128xf32>
    %c8 = arith.constant 8 : index
    %c0_40 = arith.constant 0 : index
    %c0_41 = arith.constant 0 : index
    %65 = vector.load %arg2[%c8, %c0_40, %c0_41] : memref<25x16x1xf32, #tpu.memory_space<vmem>>, vector<1x16x1xf32>
    %66 = vector.shape_cast %65 : vector<1x16x1xf32> to vector<16x1xf32>
    %c0_42 = arith.constant 0 : index
    %c0_43 = arith.constant 0 : index
    %c8_44 = arith.constant 8 : index
    %67 = vector.load %arg1[%c0_42, %c0_43, %c8_44] : memref<1x1x152xf32, #tpu.memory_space<vmem>>, vector<1x1x128xf32>
    %68 = vector.shape_cast %67 : vector<1x1x128xf32> to vector<1x128xf32>
    %69 = vector.broadcast %66 : vector<16x1xf32> to vector<16x128xf32>
    %70 = vector.broadcast %68 : vector<1x128xf32> to vector<16x128xf32>
    %71 = arith.mulf %69, %70 : vector<16x128xf32>
    %72 = arith.addf %64, %71 : vector<16x128xf32>
    %c9 = arith.constant 9 : index
    %c0_45 = arith.constant 0 : index
    %c0_46 = arith.constant 0 : index
    %73 = vector.load %arg2[%c9, %c0_45, %c0_46] : memref<25x16x1xf32, #tpu.memory_space<vmem>>, vector<1x16x1xf32>
    %74 = vector.shape_cast %73 : vector<1x16x1xf32> to vector<16x1xf32>
    %c0_47 = arith.constant 0 : index
    %c0_48 = arith.constant 0 : index
    %c9_49 = arith.constant 9 : index
    %75 = vector.load %arg1[%c0_47, %c0_48, %c9_49] : memref<1x1x152xf32, #tpu.memory_space<vmem>>, vector<1x1x128xf32>
    %76 = vector.shape_cast %75 : vector<1x1x128xf32> to vector<1x128xf32>
    %77 = vector.broadcast %74 : vector<16x1xf32> to vector<16x128xf32>
    %78 = vector.broadcast %76 : vector<1x128xf32> to vector<16x128xf32>
    %79 = arith.mulf %77, %78 : vector<16x128xf32>
    %80 = arith.addf %72, %79 : vector<16x128xf32>
    %c10 = arith.constant 10 : index
    %c0_50 = arith.constant 0 : index
    %c0_51 = arith.constant 0 : index
    %81 = vector.load %arg2[%c10, %c0_50, %c0_51] : memref<25x16x1xf32, #tpu.memory_space<vmem>>, vector<1x16x1xf32>
    %82 = vector.shape_cast %81 : vector<1x16x1xf32> to vector<16x1xf32>
    %c0_52 = arith.constant 0 : index
    %c0_53 = arith.constant 0 : index
    %c10_54 = arith.constant 10 : index
    %83 = vector.load %arg1[%c0_52, %c0_53, %c10_54] : memref<1x1x152xf32, #tpu.memory_space<vmem>>, vector<1x1x128xf32>
    %84 = vector.shape_cast %83 : vector<1x1x128xf32> to vector<1x128xf32>
    %85 = vector.broadcast %82 : vector<16x1xf32> to vector<16x128xf32>
    %86 = vector.broadcast %84 : vector<1x128xf32> to vector<16x128xf32>
    %87 = arith.mulf %85, %86 : vector<16x128xf32>
    %88 = arith.addf %80, %87 : vector<16x128xf32>
    %c11 = arith.constant 11 : index
    %c0_55 = arith.constant 0 : index
    %c0_56 = arith.constant 0 : index
    %89 = vector.load %arg2[%c11, %c0_55, %c0_56] : memref<25x16x1xf32, #tpu.memory_space<vmem>>, vector<1x16x1xf32>
    %90 = vector.shape_cast %89 : vector<1x16x1xf32> to vector<16x1xf32>
    %c0_57 = arith.constant 0 : index
    %c0_58 = arith.constant 0 : index
    %c11_59 = arith.constant 11 : index
    %91 = vector.load %arg1[%c0_57, %c0_58, %c11_59] : memref<1x1x152xf32, #tpu.memory_space<vmem>>, vector<1x1x128xf32>
    %92 = vector.shape_cast %91 : vector<1x1x128xf32> to vector<1x128xf32>
    %93 = vector.broadcast %90 : vector<16x1xf32> to vector<16x128xf32>
    %94 = vector.broadcast %92 : vector<1x128xf32> to vector<16x128xf32>
    %95 = arith.mulf %93, %94 : vector<16x128xf32>
    %96 = arith.addf %88, %95 : vector<16x128xf32>
    %c12 = arith.constant 12 : index
    %c0_60 = arith.constant 0 : index
    %c0_61 = arith.constant 0 : index
    %97 = vector.load %arg2[%c12, %c0_60, %c0_61] : memref<25x16x1xf32, #tpu.memory_space<vmem>>, vector<1x16x1xf32>
    %98 = vector.shape_cast %97 : vector<1x16x1xf32> to vector<16x1xf32>
    %c0_62 = arith.constant 0 : index
    %c0_63 = arith.constant 0 : index
    %c12_64 = arith.constant 12 : index
    %99 = vector.load %arg1[%c0_62, %c0_63, %c12_64] : memref<1x1x152xf32, #tpu.memory_space<vmem>>, vector<1x1x128xf32>
    %100 = vector.shape_cast %99 : vector<1x1x128xf32> to vector<1x128xf32>
    %101 = vector.broadcast %98 : vector<16x1xf32> to vector<16x128xf32>
    %102 = vector.broadcast %100 : vector<1x128xf32> to vector<16x128xf32>
    %103 = arith.mulf %101, %102 : vector<16x128xf32>
    %104 = arith.addf %96, %103 : vector<16x128xf32>
    %c13 = arith.constant 13 : index
    %c0_65 = arith.constant 0 : index
    %c0_66 = arith.constant 0 : index
    %105 = vector.load %arg2[%c13, %c0_65, %c0_66] : memref<25x16x1xf32, #tpu.memory_space<vmem>>, vector<1x16x1xf32>
    %106 = vector.shape_cast %105 : vector<1x16x1xf32> to vector<16x1xf32>
    %c0_67 = arith.constant 0 : index
    %c0_68 = arith.constant 0 : index
    %c13_69 = arith.constant 13 : index
    %107 = vector.load %arg1[%c0_67, %c0_68, %c13_69] : memref<1x1x152xf32, #tpu.memory_space<vmem>>, vector<1x1x128xf32>
    %108 = vector.shape_cast %107 : vector<1x1x128xf32> to vector<1x128xf32>
    %109 = vector.broadcast %106 : vector<16x1xf32> to vector<16x128xf32>
    %110 = vector.broadcast %108 : vector<1x128xf32> to vector<16x128xf32>
    %111 = arith.mulf %109, %110 : vector<16x128xf32>
    %112 = arith.addf %104, %111 : vector<16x128xf32>
    %c14 = arith.constant 14 : index
    %c0_70 = arith.constant 0 : index
    %c0_71 = arith.constant 0 : index
    %113 = vector.load %arg2[%c14, %c0_70, %c0_71] : memref<25x16x1xf32, #tpu.memory_space<vmem>>, vector<1x16x1xf32>
    %114 = vector.shape_cast %113 : vector<1x16x1xf32> to vector<16x1xf32>
    %c0_72 = arith.constant 0 : index
    %c0_73 = arith.constant 0 : index
    %c14_74 = arith.constant 14 : index
    %115 = vector.load %arg1[%c0_72, %c0_73, %c14_74] : memref<1x1x152xf32, #tpu.memory_space<vmem>>, vector<1x1x128xf32>
    %116 = vector.shape_cast %115 : vector<1x1x128xf32> to vector<1x128xf32>
    %117 = vector.broadcast %114 : vector<16x1xf32> to vector<16x128xf32>
    %118 = vector.broadcast %116 : vector<1x128xf32> to vector<16x128xf32>
    %119 = arith.mulf %117, %118 : vector<16x128xf32>
    %120 = arith.addf %112, %119 : vector<16x128xf32>
    %c15 = arith.constant 15 : index
    %c0_75 = arith.constant 0 : index
    %c0_76 = arith.constant 0 : index
    %121 = vector.load %arg2[%c15, %c0_75, %c0_76] : memref<25x16x1xf32, #tpu.memory_space<vmem>>, vector<1x16x1xf32>
    %122 = vector.shape_cast %121 : vector<1x16x1xf32> to vector<16x1xf32>
    %c0_77 = arith.constant 0 : index
    %c0_78 = arith.constant 0 : index
    %c15_79 = arith.constant 15 : index
    %123 = vector.load %arg1[%c0_77, %c0_78, %c15_79] : memref<1x1x152xf32, #tpu.memory_space<vmem>>, vector<1x1x128xf32>
    %124 = vector.shape_cast %123 : vector<1x1x128xf32> to vector<1x128xf32>
    %125 = vector.broadcast %122 : vector<16x1xf32> to vector<16x128xf32>
    %126 = vector.broadcast %124 : vector<1x128xf32> to vector<16x128xf32>
    %127 = arith.mulf %125, %126 : vector<16x128xf32>
    %128 = arith.addf %120, %127 : vector<16x128xf32>
    %c16 = arith.constant 16 : index
    %c0_80 = arith.constant 0 : index
    %c0_81 = arith.constant 0 : index
    %129 = vector.load %arg2[%c16, %c0_80, %c0_81] : memref<25x16x1xf32, #tpu.memory_space<vmem>>, vector<1x16x1xf32>
    %130 = vector.shape_cast %129 : vector<1x16x1xf32> to vector<16x1xf32>
    %c0_82 = arith.constant 0 : index
    %c0_83 = arith.constant 0 : index
    %c16_84 = arith.constant 16 : index
    %131 = vector.load %arg1[%c0_82, %c0_83, %c16_84] : memref<1x1x152xf32, #tpu.memory_space<vmem>>, vector<1x1x128xf32>
    %132 = vector.shape_cast %131 : vector<1x1x128xf32> to vector<1x128xf32>
    %133 = vector.broadcast %130 : vector<16x1xf32> to vector<16x128xf32>
    %134 = vector.broadcast %132 : vector<1x128xf32> to vector<16x128xf32>
    %135 = arith.mulf %133, %134 : vector<16x128xf32>
    %136 = arith.addf %128, %135 : vector<16x128xf32>
    %c17 = arith.constant 17 : index
    %c0_85 = arith.constant 0 : index
    %c0_86 = arith.constant 0 : index
    %137 = vector.load %arg2[%c17, %c0_85, %c0_86] : memref<25x16x1xf32, #tpu.memory_space<vmem>>, vector<1x16x1xf32>
    %138 = vector.shape_cast %137 : vector<1x16x1xf32> to vector<16x1xf32>
    %c0_87 = arith.constant 0 : index
    %c0_88 = arith.constant 0 : index
    %c17_89 = arith.constant 17 : index
    %139 = vector.load %arg1[%c0_87, %c0_88, %c17_89] : memref<1x1x152xf32, #tpu.memory_space<vmem>>, vector<1x1x128xf32>
    %140 = vector.shape_cast %139 : vector<1x1x128xf32> to vector<1x128xf32>
    %141 = vector.broadcast %138 : vector<16x1xf32> to vector<16x128xf32>
    %142 = vector.broadcast %140 : vector<1x128xf32> to vector<16x128xf32>
    %143 = arith.mulf %141, %142 : vector<16x128xf32>
    %144 = arith.addf %136, %143 : vector<16x128xf32>
    %c18 = arith.constant 18 : index
    %c0_90 = arith.constant 0 : index
    %c0_91 = arith.constant 0 : index
    %145 = vector.load %arg2[%c18, %c0_90, %c0_91] : memref<25x16x1xf32, #tpu.memory_space<vmem>>, vector<1x16x1xf32>
    %146 = vector.shape_cast %145 : vector<1x16x1xf32> to vector<16x1xf32>
    %c0_92 = arith.constant 0 : index
    %c0_93 = arith.constant 0 : index
    %c18_94 = arith.constant 18 : index
    %147 = vector.load %arg1[%c0_92, %c0_93, %c18_94] : memref<1x1x152xf32, #tpu.memory_space<vmem>>, vector<1x1x128xf32>
    %148 = vector.shape_cast %147 : vector<1x1x128xf32> to vector<1x128xf32>
    %149 = vector.broadcast %146 : vector<16x1xf32> to vector<16x128xf32>
    %150 = vector.broadcast %148 : vector<1x128xf32> to vector<16x128xf32>
    %151 = arith.mulf %149, %150 : vector<16x128xf32>
    %152 = arith.addf %144, %151 : vector<16x128xf32>
    %c19 = arith.constant 19 : index
    %c0_95 = arith.constant 0 : index
    %c0_96 = arith.constant 0 : index
    %153 = vector.load %arg2[%c19, %c0_95, %c0_96] : memref<25x16x1xf32, #tpu.memory_space<vmem>>, vector<1x16x1xf32>
    %154 = vector.shape_cast %153 : vector<1x16x1xf32> to vector<16x1xf32>
    %c0_97 = arith.constant 0 : index
    %c0_98 = arith.constant 0 : index
    %c19_99 = arith.constant 19 : index
    %155 = vector.load %arg1[%c0_97, %c0_98, %c19_99] : memref<1x1x152xf32, #tpu.memory_space<vmem>>, vector<1x1x128xf32>
    %156 = vector.shape_cast %155 : vector<1x1x128xf32> to vector<1x128xf32>
    %157 = vector.broadcast %154 : vector<16x1xf32> to vector<16x128xf32>
    %158 = vector.broadcast %156 : vector<1x128xf32> to vector<16x128xf32>
    %159 = arith.mulf %157, %158 : vector<16x128xf32>
    %160 = arith.addf %152, %159 : vector<16x128xf32>
    %c20 = arith.constant 20 : index
    %c0_100 = arith.constant 0 : index
    %c0_101 = arith.constant 0 : index
    %161 = vector.load %arg2[%c20, %c0_100, %c0_101] : memref<25x16x1xf32, #tpu.memory_space<vmem>>, vector<1x16x1xf32>
    %162 = vector.shape_cast %161 : vector<1x16x1xf32> to vector<16x1xf32>
    %c0_102 = arith.constant 0 : index
    %c0_103 = arith.constant 0 : index
    %c20_104 = arith.constant 20 : index
    %163 = vector.load %arg1[%c0_102, %c0_103, %c20_104] : memref<1x1x152xf32, #tpu.memory_space<vmem>>, vector<1x1x128xf32>
    %164 = vector.shape_cast %163 : vector<1x1x128xf32> to vector<1x128xf32>
    %165 = vector.broadcast %162 : vector<16x1xf32> to vector<16x128xf32>
    %166 = vector.broadcast %164 : vector<1x128xf32> to vector<16x128xf32>
    %167 = arith.mulf %165, %166 : vector<16x128xf32>
    %168 = arith.addf %160, %167 : vector<16x128xf32>
    %c21 = arith.constant 21 : index
    %c0_105 = arith.constant 0 : index
    %c0_106 = arith.constant 0 : index
    %169 = vector.load %arg2[%c21, %c0_105, %c0_106] : memref<25x16x1xf32, #tpu.memory_space<vmem>>, vector<1x16x1xf32>
    %170 = vector.shape_cast %169 : vector<1x16x1xf32> to vector<16x1xf32>
    %c0_107 = arith.constant 0 : index
    %c0_108 = arith.constant 0 : index
    %c21_109 = arith.constant 21 : index
    %171 = vector.load %arg1[%c0_107, %c0_108, %c21_109] : memref<1x1x152xf32, #tpu.memory_space<vmem>>, vector<1x1x128xf32>
    %172 = vector.shape_cast %171 : vector<1x1x128xf32> to vector<1x128xf32>
    %173 = vector.broadcast %170 : vector<16x1xf32> to vector<16x128xf32>
    %174 = vector.broadcast %172 : vector<1x128xf32> to vector<16x128xf32>
    %175 = arith.mulf %173, %174 : vector<16x128xf32>
    %176 = arith.addf %168, %175 : vector<16x128xf32>
    %c22 = arith.constant 22 : index
    %c0_110 = arith.constant 0 : index
    %c0_111 = arith.constant 0 : index
    %177 = vector.load %arg2[%c22, %c0_110, %c0_111] : memref<25x16x1xf32, #tpu.memory_space<vmem>>, vector<1x16x1xf32>
    %178 = vector.shape_cast %177 : vector<1x16x1xf32> to vector<16x1xf32>
    %c0_112 = arith.constant 0 : index
    %c0_113 = arith.constant 0 : index
    %c22_114 = arith.constant 22 : index
    %179 = vector.load %arg1[%c0_112, %c0_113, %c22_114] : memref<1x1x152xf32, #tpu.memory_space<vmem>>, vector<1x1x128xf32>
    %180 = vector.shape_cast %179 : vector<1x1x128xf32> to vector<1x128xf32>
    %181 = vector.broadcast %178 : vector<16x1xf32> to vector<16x128xf32>
    %182 = vector.broadcast %180 : vector<1x128xf32> to vector<16x128xf32>
    %183 = arith.mulf %181, %182 : vector<16x128xf32>
    %184 = arith.addf %176, %183 : vector<16x128xf32>
    %c23 = arith.constant 23 : index
    %c0_115 = arith.constant 0 : index
    %c0_116 = arith.constant 0 : index
    %185 = vector.load %arg2[%c23, %c0_115, %c0_116] : memref<25x16x1xf32, #tpu.memory_space<vmem>>, vector<1x16x1xf32>
    %186 = vector.shape_cast %185 : vector<1x16x1xf32> to vector<16x1xf32>
    %c0_117 = arith.constant 0 : index
    %c0_118 = arith.constant 0 : index
    %c23_119 = arith.constant 23 : index
    %187 = vector.load %arg1[%c0_117, %c0_118, %c23_119] : memref<1x1x152xf32, #tpu.memory_space<vmem>>, vector<1x1x128xf32>
    %188 = vector.shape_cast %187 : vector<1x1x128xf32> to vector<1x128xf32>
    %189 = vector.broadcast %186 : vector<16x1xf32> to vector<16x128xf32>
    %190 = vector.broadcast %188 : vector<1x128xf32> to vector<16x128xf32>
    %191 = arith.mulf %189, %190 : vector<16x128xf32>
    %192 = arith.addf %184, %191 : vector<16x128xf32>
    %c24 = arith.constant 24 : index
    %c0_120 = arith.constant 0 : index
    %c0_121 = arith.constant 0 : index
    %193 = vector.load %arg2[%c24, %c0_120, %c0_121] : memref<25x16x1xf32, #tpu.memory_space<vmem>>, vector<1x16x1xf32>
    %194 = vector.shape_cast %193 : vector<1x16x1xf32> to vector<16x1xf32>
    %c0_122 = arith.constant 0 : index
    %c0_123 = arith.constant 0 : index
    %c24_124 = arith.constant 24 : index
    %195 = vector.load %arg1[%c0_122, %c0_123, %c24_124] : memref<1x1x152xf32, #tpu.memory_space<vmem>>, vector<1x1x128xf32>
    %196 = vector.shape_cast %195 : vector<1x1x128xf32> to vector<1x128xf32>
    %197 = vector.broadcast %194 : vector<16x1xf32> to vector<16x128xf32>
    %198 = vector.broadcast %196 : vector<1x128xf32> to vector<16x128xf32>
    %199 = arith.mulf %197, %198 : vector<16x128xf32>
    %200 = arith.addf %192, %199 : vector<16x128xf32>
    %c0_125 = arith.constant 0 : index
    %c0_126 = arith.constant 0 : index
    %c0_127 = arith.constant 0 : index
    %201 = vector.load %arg6[%c0_125, %c0_126, %c0_127] : memref<3x16x1xf32, #tpu.memory_space<vmem>>, vector<1x16x1xf32>
    %202 = vector.shape_cast %201 : vector<1x16x1xf32> to vector<16x1xf32>
    %203 = vector.broadcast %202 : vector<16x1xf32> to vector<16x128xf32>
    %204 = arith.addf %200, %203 : vector<16x128xf32>
    %cst_128 = arith.constant 0.000000e+00 : f32
    %205 = vector.broadcast %cst_128 : f32 to vector<16x128xf32>
    %206 = arith.cmpf ogt, %204, %205 : vector<16x128xf32>
    %cst_129 = arith.constant 0.000000e+00 : f32
    %207 = vector.broadcast %cst_129 : f32 to vector<16x128xf32>
    %208 = arith.minimumf %204, %207 : vector<16x128xf32>
    %209 = math.exp %208 : vector<16x128xf32>
    %cst_130 = arith.constant 1.000000e+00 : f32
    %210 = vector.broadcast %cst_130 : f32 to vector<16x128xf32>
    %211 = arith.subf %209, %210 : vector<16x128xf32>
    %212 = arith.select %206, %204, %211 : vector<16x128xi1>, vector<16x128xf32>
    %cst_131 = arith.constant 0.000000e+00 : f32
    %213 = vector.broadcast %cst_131 : f32 to vector<16x384xf32>
    %c0_132 = arith.constant 0 : index
    %c0_133 = arith.constant 0 : index
    %214 = vector.load %arg8[%c0_132, %c0_133] : memref<16x384xf32, #tpu.memory_space<vmem>>, vector<16x384xf32>
    tpu.vector_store %arg8[%c0_132, %c0_133], %213 {strides = array<i32>} : memref<16x384xf32, #tpu.memory_space<vmem>>, vector<16x384xf32>,
    %c0_134 = arith.constant 0 : index
    %c128 = arith.constant 128 : index
    %215 = vector.load %arg8[%c0_134, %c128] : memref<16x384xf32, #tpu.memory_space<vmem>>, vector<16x128xf32>
    tpu.vector_store %arg8[%c0_134, %c128], %212 {strides = array<i32>} : memref<16x384xf32, #tpu.memory_space<vmem>>, vector<16x128xf32>,
    %cst_135 = arith.constant 0.000000e+00 : f32
    %216 = vector.broadcast %cst_135 : f32 to vector<16x128xf32>
    %c0_136 = arith.constant 0 : index
    %c0_137 = arith.constant 0 : index
    %c0_138 = arith.constant 0 : index
    %217 = vector.load %arg3[%c0_136, %c0_137, %c0_138] : memref<3x16x1xf32, #tpu.memory_space<vmem>>, vector<1x16x1xf32>
    %218 = vector.shape_cast %217 : vector<1x16x1xf32> to vector<16x1xf32>
    %c0_139 = arith.constant 0 : index
    %c127 = arith.constant 127 : index
    %219 = vector.load %arg8[%c0_139, %c127] : memref<16x384xf32, #tpu.memory_space<vmem>>, vector<16x128xf32>
    %220 = vector.broadcast %218 : vector<16x1xf32> to vector<16x128xf32>
    %221 = arith.mulf %220, %219 : vector<16x128xf32>
    %222 = arith.addf %216, %221 : vector<16x128xf32>
    %c1_140 = arith.constant 1 : index
    %c0_141 = arith.constant 0 : index
    %c0_142 = arith.constant 0 : index
    %223 = vector.load %arg3[%c1_140, %c0_141, %c0_142] : memref<3x16x1xf32, #tpu.memory_space<vmem>>, vector<1x16x1xf32>
    %224 = vector.shape_cast %223 : vector<1x16x1xf32> to vector<16x1xf32>
    %c0_143 = arith.constant 0 : index
    %c128_144 = arith.constant 128 : index
    %225 = vector.load %arg8[%c0_143, %c128_144] : memref<16x384xf32, #tpu.memory_space<vmem>>, vector<16x128xf32>
    %226 = vector.broadcast %224 : vector<16x1xf32> to vector<16x128xf32>
    %227 = arith.mulf %226, %225 : vector<16x128xf32>
    %228 = arith.addf %222, %227 : vector<16x128xf32>
    %c2_145 = arith.constant 2 : index
    %c0_146 = arith.constant 0 : index
    %c0_147 = arith.constant 0 : index
    %229 = vector.load %arg3[%c2_145, %c0_146, %c0_147] : memref<3x16x1xf32, #tpu.memory_space<vmem>>, vector<1x16x1xf32>
    %230 = vector.shape_cast %229 : vector<1x16x1xf32> to vector<16x1xf32>
    %c0_148 = arith.constant 0 : index
    %c129 = arith.constant 129 : index
    %231 = vector.load %arg8[%c0_148, %c129] : memref<16x384xf32, #tpu.memory_space<vmem>>, vector<16x128xf32>
    %232 = vector.broadcast %230 : vector<16x1xf32> to vector<16x128xf32>
    %233 = arith.mulf %232, %231 : vector<16x128xf32>
    %234 = arith.addf %228, %233 : vector<16x128xf32>
    %c1_149 = arith.constant 1 : index
    %c0_150 = arith.constant 0 : index
    %c0_151 = arith.constant 0 : index
    %235 = vector.load %arg6[%c1_149, %c0_150, %c0_151] : memref<3x16x1xf32, #tpu.memory_space<vmem>>, vector<1x16x1xf32>
    %236 = vector.shape_cast %235 : vector<1x16x1xf32> to vector<16x1xf32>
    %237 = vector.broadcast %236 : vector<16x1xf32> to vector<16x128xf32>
    %238 = arith.addf %234, %237 : vector<16x128xf32>
    %cst_152 = arith.constant 0.000000e+00 : f32
    %239 = vector.broadcast %cst_152 : f32 to vector<16x128xf32>
    %240 = arith.cmpf ogt, %238, %239 : vector<16x128xf32>
    %cst_153 = arith.constant 0.000000e+00 : f32
    %241 = vector.broadcast %cst_153 : f32 to vector<16x128xf32>
    %242 = arith.minimumf %238, %241 : vector<16x128xf32>
    %243 = math.exp %242 : vector<16x128xf32>
    %cst_154 = arith.constant 1.000000e+00 : f32
    %244 = vector.broadcast %cst_154 : f32 to vector<16x128xf32>
    %245 = arith.subf %243, %244 : vector<16x128xf32>
    %246 = arith.select %240, %238, %245 : vector<16x128xi1>, vector<16x128xf32>
    %c0_155 = arith.constant 0 : index
    %c128_156 = arith.constant 128 : index
    %247 = vector.load %arg8[%c0_155, %c128_156] : memref<16x384xf32, #tpu.memory_space<vmem>>, vector<16x128xf32>
    tpu.vector_store %arg8[%c0_155, %c128_156], %246 {strides = array<i32>} : memref<16x384xf32, #tpu.memory_space<vmem>>, vector<16x128xf32>,
    %cst_157 = arith.constant 0.000000e+00 : f32
    %248 = vector.broadcast %cst_157 : f32 to vector<16x128xf32>
    %c0_158 = arith.constant 0 : index
    %c0_159 = arith.constant 0 : index
    %c0_160 = arith.constant 0 : index
    %249 = vector.load %arg4[%c0_158, %c0_159, %c0_160] : memref<3x16x1xf32, #tpu.memory_space<vmem>>, vector<1x16x1xf32>
    %250 = vector.shape_cast %249 : vector<1x16x1xf32> to vector<16x1xf32>
    %c0_161 = arith.constant 0 : index
    %c127_162 = arith.constant 127 : index
    %251 = vector.load %arg8[%c0_161, %c127_162] : memref<16x384xf32, #tpu.memory_space<vmem>>, vector<16x128xf32>
    %252 = vector.broadcast %250 : vector<16x1xf32> to vector<16x128xf32>
    %253 = arith.mulf %252, %251 : vector<16x128xf32>
    %254 = arith.addf %248, %253 : vector<16x128xf32>
    %c1_163 = arith.constant 1 : index
    %c0_164 = arith.constant 0 : index
    %c0_165 = arith.constant 0 : index
    %255 = vector.load %arg4[%c1_163, %c0_164, %c0_165] : memref<3x16x1xf32, #tpu.memory_space<vmem>>, vector<1x16x1xf32>
    %256 = vector.shape_cast %255 : vector<1x16x1xf32> to vector<16x1xf32>
    %c0_166 = arith.constant 0 : index
    %c128_167 = arith.constant 128 : index
    %257 = vector.load %arg8[%c0_166, %c128_167] : memref<16x384xf32, #tpu.memory_space<vmem>>, vector<16x128xf32>
    %258 = vector.broadcast %256 : vector<16x1xf32> to vector<16x128xf32>
    %259 = arith.mulf %258, %257 : vector<16x128xf32>
    %260 = arith.addf %254, %259 : vector<16x128xf32>
    %c2_168 = arith.constant 2 : index
    %c0_169 = arith.constant 0 : index
    %c0_170 = arith.constant 0 : index
    %261 = vector.load %arg4[%c2_168, %c0_169, %c0_170] : memref<3x16x1xf32, #tpu.memory_space<vmem>>, vector<1x16x1xf32>
    %262 = vector.shape_cast %261 : vector<1x16x1xf32> to vector<16x1xf32>
    %c0_171 = arith.constant 0 : index
    %c129_172 = arith.constant 129 : index
    %263 = vector.load %arg8[%c0_171, %c129_172] : memref<16x384xf32, #tpu.memory_space<vmem>>, vector<16x128xf32>
    %264 = vector.broadcast %262 : vector<16x1xf32> to vector<16x128xf32>
    %265 = arith.mulf %264, %263 : vector<16x128xf32>
    %266 = arith.addf %260, %265 : vector<16x128xf32>
    %c0_173 = arith.constant 0 : index
    %c0_174 = arith.constant 0 : index
    %267 = vector.load %arg5[%c0_173, %c0_174] : memref<16x16xf32, #tpu.memory_space<vmem>>, vector<16x16xf32>
    %cst_175 = arith.constant dense<0.000000e+00> : vector<16x128xf32>
    %268 = tpu.matmul %267, %266, %cst_175 {dimension_numbers = #tpu.dot_dimension_numbers<[1], [0], [0], [1], [0, 0, 1, 1], [], []>} : vector<16x16xf32>, vector<16x128xf32>, vector<16x128xf32> -> vector<16x128xf32>
    %c2_176 = arith.constant 2 : index
    %c0_177 = arith.constant 0 : index
    %c0_178 = arith.constant 0 : index
    %269 = vector.load %arg6[%c2_176, %c0_177, %c0_178] : memref<3x16x1xf32, #tpu.memory_space<vmem>>, vector<1x16x1xf32>
    %270 = vector.shape_cast %269 : vector<1x16x1xf32> to vector<16x1xf32>
    %271 = vector.broadcast %270 : vector<16x1xf32> to vector<16x128xf32>
    %272 = arith.addf %268, %271 : vector<16x128xf32>
    %cst_179 = arith.constant 0.000000e+00 : f32
    %273 = vector.broadcast %cst_179 : f32 to vector<16x128xf32>
    %274 = arith.cmpf ogt, %272, %273 : vector<16x128xf32>
    %cst_180 = arith.constant 0.000000e+00 : f32
    %275 = vector.broadcast %cst_180 : f32 to vector<16x128xf32>
    %276 = arith.minimumf %272, %275 : vector<16x128xf32>
    %277 = math.exp %276 : vector<16x128xf32>
    %cst_181 = arith.constant 1.000000e+00 : f32
    %278 = vector.broadcast %cst_181 : f32 to vector<16x128xf32>
    %279 = arith.subf %277, %278 : vector<16x128xf32>
    %280 = arith.select %274, %272, %279 : vector<16x128xi1>, vector<16x128xf32>
    %cst_182 = arith.constant dense<0.000000e+00> : vector<16xf32>
    %281 = vector.multi_reduction <add>, %280, %cst_182 [1] : vector<16x128xf32> to vector<16xf32>
    %282 = vector.shape_cast %281 : vector<16xf32> to vector<16x1xf32>
    %cst_183 = arith.constant 1.280000e+02 : f32
    %283 = vector.broadcast %cst_183 : f32 to vector<16x1xf32>
    %284 = arith.divf %282, %283 : vector<16x1xf32>
    %c0_184 = arith.constant 0 : index
    %c0_185 = arith.constant 0 : index
    %c0_186 = arith.constant 0 : index
    %285 = vector.load %arg7[%c0_184, %c0_185, %c0_186] : memref<1x16x1xf32, #tpu.memory_space<vmem>>, vector<1x16x1xf32>
    %286 = vector.shape_cast %285 : vector<1x16x1xf32> to vector<16x1xf32>
    %287 = vector.shape_cast %284 : vector<16x1xf32> to vector<1x16x1xf32>
    tpu.vector_store %arg7[%c0_184, %c0_185, %c0_186], %287 {strides = array<i32>} : memref<1x16x1xf32, #tpu.memory_space<vmem>>, vector<1x16x1xf32>,
    return
  }
  func.func @transform_0(%arg0: i32) -> (i32, i32, i32) {
    %c0_i32 = arith.constant 0 : i32
    %c0_i32_0 = arith.constant 0 : i32
    %c0_i32_1 = arith.constant 0 : i32
    return %arg0, %c0_i32, %c0_i32_0 : i32, i32, i32
  }
  func.func @transform_1(%arg0: i32) -> (i32, i32, i32) {
    %c0_i32 = arith.constant 0 : i32
    %c0_i32_0 = arith.constant 0 : i32
    %c0_i32_1 = arith.constant 0 : i32
    %c0_i32_2 = arith.constant 0 : i32
    return %c0_i32, %c0_i32_0, %c0_i32_1 : i32, i32, i32
  }
  func.func @transform_2(%arg0: i32) -> (i32, i32, i32) {
    %c0_i32 = arith.constant 0 : i32
    %c0_i32_0 = arith.constant 0 : i32
    %c0_i32_1 = arith.constant 0 : i32
    %c0_i32_2 = arith.constant 0 : i32
    return %c0_i32, %c0_i32_0, %c0_i32_1 : i32, i32, i32
  }
  func.func @transform_3(%arg0: i32) -> (i32, i32, i32) {
    %c0_i32 = arith.constant 0 : i32
    %c0_i32_0 = arith.constant 0 : i32
    %c0_i32_1 = arith.constant 0 : i32
    %c0_i32_2 = arith.constant 0 : i32
    return %c0_i32, %c0_i32_0, %c0_i32_1 : i32, i32, i32
  }
  func.func @transform_4(%arg0: i32) -> (i32, i32) {
    %c0_i32 = arith.constant 0 : i32
    %c0_i32_0 = arith.constant 0 : i32
    %c0_i32_1 = arith.constant 0 : i32
    return %c0_i32, %c0_i32_0 : i32, i32
  }
  func.func @transform_5(%arg0: i32) -> (i32, i32, i32) {
    %c0_i32 = arith.constant 0 : i32
    %c0_i32_0 = arith.constant 0 : i32
    %c0_i32_1 = arith.constant 0 : i32
    %c0_i32_2 = arith.constant 0 : i32
    return %c0_i32, %c0_i32_0, %c0_i32_1 : i32, i32, i32
  }
  func.func @transform_6(%arg0: i32) -> (i32, i32, i32) {
    %c0_i32 = arith.constant 0 : i32
    %c0_i32_0 = arith.constant 0 : i32
    %c0_i32_1 = arith.constant 0 : i32
    return %arg0, %c0_i32, %c0_i32_0 : i32, i32, i32
  }
}

</mosaic_0001>

<llo_original>
// kernel: tpu_custom_call.1
$region0: #{tpu_custom_call.1}
  #allocation0 [shape = 'u32[]', space=smem, size = 0x4, offset = 0x4, fixed_abs, tag = 'smem constant byte address 0x4 - core index']
  #allocation1 [shape = 'u32[144,128]{1,0:T(1,128)}', space=vmem, size = 0x12000, scoped, tag = 'internal scratch']
  #allocation2 [shape = 'f32[16,384]{1,0:T(8,128)}', space=vmem, size = 0x6000, scoped, tag = 'scratch operand']
  %s0 = inlined_call_operand.vmem [shape: f32[2,1,152], index: 0, kind: input, shape index: {}]
  %s1 = inlined_call_operand.vmem [shape: f32[25,16,1], index: 1, kind: input, shape index: {}]
  %s2 = inlined_call_operand.vmem [shape: f32[3,16,1], index: 2, kind: input, shape index: {}]
  %s3 = inlined_call_operand.vmem [shape: f32[3,16,1], index: 3, kind: input, shape index: {}]
  %s4 = inlined_call_operand.vmem [shape: f32[16,16], index: 4, kind: input, shape index: {}]
  %s5 = inlined_call_operand.vmem [shape: f32[3,16,1], index: 5, kind: input, shape index: {}]
  %s6 = inlined_call_operand.vmem [shape: f32[2,16,1], index: 6, kind: output, shape index: {}]
  %s7 = sld [smem:[#allocation0]]
  $region57: #{tpu_custom_call.1} parent=0
    _
  %s9 = ssub.s32 1, %s7
  %s10 = scalar_select 0, %s9, %s7
  loop: start=0, step=1, limit=4
  $region2: #{tpu_custom_call.1} parent=0 // loop_pre_header
    _
  $region3: #{tpu_custom_call.1} parent=0 // loop_header
    %s12 = sphi 0, %s16
    %p13 = scmp.ge.s32.totalorder %s12, 4
    %s22 = sphi 0, %s24
    %s25 = sphi 0, %s22
    %s26 = sphi 0, %s25
    %s42 = sphi 0, %s26
    %s46 = sphi 0, %s46
    %s48 = sphi 0, %s46
    %s49 = sphi 0, %s48
    %s63 = sphi 0, %s49
    %s67 = sphi 0, %s67
    %s69 = sphi 0, %s67
    %s70 = sphi 0, %s69
    %s84 = sphi 0, %s70
    %s88 = sphi 0, %s88
    %s90 = sphi 0, %s88
    %s91 = sphi 0, %s90
    %s105 = sphi 0, %s91
    %s109 = sphi 0, %s109
    %s111 = sphi 0, %s109
    %s112 = sphi 0, %s111
    %s126 = sphi 0, %s112
    %s130 = sphi 0, %s130
    %s132 = sphi 0, %s130
    %s133 = sphi 0, %s132
    %s147 = sphi 0, %s133
    %s153 = sphi 0, %s155
    %s156 = sphi 0, %s153
    %s157 = sphi 0, %s156
    %s173 = sphi 0, %s157
  $region4: #{tpu_custom_call.1} parent=0 // loop_header_branch
    %15 = sbr.rel (%p13) target = $region8
  $region5: #{tpu_custom_call.1} parent=0 // loop_body
    %s17 = ssub.s32 %s12, 1
    %s18 = ssub.s32 %s12, 2
    %s19 = sadd.s32 %s12, 1
    %s20 = ssub.s32 %s12, %s19
    %p21 = scmp.eq.s32.totalorder %s20, 0
    %s23 = sadd.s32 %s22, 1
    %s24 = scalar_select %p21, %s22, %s23
    %p27 = pneg %p21
    %p28 = scmp.eq.s32.totalorder %s12, 1
    %p29 = por %p27, %p28
    %p30 = scmp.ne.s32.totalorder %s22, %s25
    %p31 = scmp.eq.s32.totalorder %s12, 0
    %p32 = por %p30, %p31
    %p33 = scmp.ne.s32.totalorder %s22, %s25
    %p34 = scmp.eq.s32.totalorder %s17, 1
    %p35 = por %p33, %p34
    %p36 = scmp.ne.s32.totalorder %s25, %s26
    %p37 = scmp.eq.s32.totalorder %s17, 0
    %p38 = por %p36, %p37
    %p39 = scmp.ne.s32.totalorder %s25, %s26
    %p40 = scmp.eq.s32.totalorder %s18, 1
    %p41 = por %p39, %p40
    %p43 = scmp.ne.s32.totalorder %s26, %s42
    %p44 = scmp.eq.s32.totalorder %s18, 0
    %p45 = por %p43, %p44
    %s47 = sadd.s32 %s46, 1
    %p50 = scmp.eq.s32.totalorder %s12, 1
    %p51 = scmp.ne.s32.totalorder %s46, %s48
    %p52 = scmp.eq.s32.totalorder %s12, 0
    %p53 = por %p51, %p52
    %p54 = scmp.ne.s32.totalorder %s46, %s48
    %p55 = scmp.eq.s32.totalorder %s17, 1
    %p56 = por %p54, %p55
    %p57 = scmp.ne.s32.totalorder %s48, %s49
    %p58 = scmp.eq.s32.totalorder %s17, 0
    %p59 = por %p57, %p58
    %p60 = scmp.ne.s32.totalorder %s48, %s49
    %p61 = scmp.eq.s32.totalorder %s18, 1
    %p62 = por %p60, %p61
    %p64 = scmp.ne.s32.totalorder %s49, %s63
    %p65 = scmp.eq.s32.totalorder %s18, 0
    %p66 = por %p64, %p65
    %s68 = sadd.s32 %s67, 1
    %p71 = scmp.eq.s32.totalorder %s12, 1
    %p72 = scmp.ne.s32.totalorder %s67, %s69
    %p73 = scmp.eq.s32.totalorder %s12, 0
    %p74 = por %p72, %p73
    %p75 = scmp.ne.s32.totalorder %s67, %s69
    %p76 = scmp.eq.s32.totalorder %s17, 1
    %p77 = por %p75, %p76
    %p78 = scmp.ne.s32.totalorder %s69, %s70
    %p79 = scmp.eq.s32.totalorder %s17, 0
    %p80 = por %p78, %p79
    %p81 = scmp.ne.s32.totalorder %s69, %s70
    %p82 = scmp.eq.s32.totalorder %s18, 1
    %p83 = por %p81, %p82
    %p85 = scmp.ne.s32.totalorder %s70, %s84
    %p86 = scmp.eq.s32.totalorder %s18, 0
    %p87 = por %p85, %p86
    %s89 = sadd.s32 %s88, 1
    %p92 = scmp.eq.s32.totalorder %s12, 1
    %p93 = scmp.ne.s32.totalorder %s88, %s90
    %p94 = scmp.eq.s32.totalorder %s12, 0
    %p95 = por %p93, %p94
    %p96 = scmp.ne.s32.totalorder %s88, %s90
    %p97 = scmp.eq.s32.totalorder %s17, 1
    %p98 = por %p96, %p97
    %p99 = scmp.ne.s32.totalorder %s90, %s91
    %p100 = scmp.eq.s32.totalorder %s17, 0
    %p101 = por %p99, %p100
    %p102 = scmp.ne.s32.totalorder %s90, %s91
    %p103 = scmp.eq.s32.totalorder %s18, 1
    %p104 = por %p102, %p103
    %p106 = scmp.ne.s32.totalorder %s91, %s105
    %p107 = scmp.eq.s32.totalorder %s18, 0
    %p108 = por %p106, %p107
    %s110 = sadd.s32 %s109, 1
    %p113 = scmp.eq.s32.totalorder %s12, 1
    %p114 = scmp.ne.s32.totalorder %s109, %s111
    %p115 = scmp.eq.s32.totalorder %s12, 0
    %p116 = por %p114, %p115
    %p117 = scmp.ne.s32.totalorder %s109, %s111
    %p118 = scmp.eq.s32.totalorder %s17, 1
    %p119 = por %p117, %p118
    %p120 = scmp.ne.s32.totalorder %s111, %s112
    %p121 = scmp.eq.s32.totalorder %s17, 0
    %p122 = por %p120, %p121
    %p123 = scmp.ne.s32.totalorder %s111, %s112
    %p124 = scmp.eq.s32.totalorder %s18, 1
    %p125 = por %p123, %p124
    %p127 = scmp.ne.s32.totalorder %s112, %s126
    %p128 = scmp.eq.s32.totalorder %s18, 0
    %p129 = por %p127, %p128
    %s131 = sadd.s32 %s130, 1
    %p134 = scmp.eq.s32.totalorder %s12, 1
    %p135 = scmp.ne.s32.totalorder %s130, %s132
    %p136 = scmp.eq.s32.totalorder %s12, 0
    %p137 = por %p135, %p136
    %p138 = scmp.ne.s32.totalorder %s130, %s132
    %p139 = scmp.eq.s32.totalorder %s17, 1
    %p140 = por %p138, %p139
    %p141 = scmp.ne.s32.totalorder %s132, %s133
    %p142 = scmp.eq.s32.totalorder %s17, 0
    %p143 = por %p141, %p142
    %p144 = scmp.ne.s32.totalorder %s132, %s133
    %p145 = scmp.eq.s32.totalorder %s18, 1
    %p146 = por %p144, %p145
    %p148 = scmp.ne.s32.totalorder %s133, %s147
    %p149 = scmp.eq.s32.totalorder %s18, 0
    %p150 = por %p148, %p149
    %s151 = ssub.s32 %s12, %s19
    %p152 = scmp.eq.s32.totalorder %s151, 0
    %s154 = sadd.s32 %s153, 1
    %s155 = scalar_select %p152, %s153, %s154
    %p158 = pneg %p152
    %p159 = scmp.eq.s32.totalorder %s12, 1
    %p160 = por %p158, %p159
    %p161 = scmp.ne.s32.totalorder %s153, %s156
    %p162 = scmp.eq.s32.totalorder %s12, 0
    %p163 = por %p161, %p162
    %p164 = scmp.ne.s32.totalorder %s153, %s156
    %p165 = scmp.eq.s32.totalorder %s17, 1
    %p166 = por %p164, %p165
    %p167 = scmp.ne.s32.totalorder %s156, %s157
    %p168 = scmp.eq.s32.totalorder %s17, 0
    %p169 = por %p167, %p168
    %p170 = scmp.ne.s32.totalorder %s156, %s157
    %p171 = scmp.eq.s32.totalorder %s18, 1
    %p172 = por %p170, %p171
    %p174 = scmp.ne.s32.totalorder %s157, %s173
    %p175 = scmp.eq.s32.totalorder %s18, 0
    %p176 = por %p174, %p175
    %p177 = scmp.le.s32.totalorder 1, %s12
    %p178 = scmp.lt.s32.totalorder %s12, 3
    %p179 = pnand %p177, %p178
    %p180 = pneg %p179
    // Predicated region
    $region9: #{tpu_custom_call.1} parent=5 // pred_check
      _
    $region10: #{tpu_custom_call.1} parent=5 // pred_check_branch
      %182 = sbr.rel (%p179) target = $region12
    $region11: #{tpu_custom_call.1} parent=5 // pred_region
      %s183 = ssub.s32 %s12, 1
      // Predicated region
      $region13: #{tpu_custom_call.1} parent=11 // pred_check
        %p184 = pneg %p59
      $region14: #{tpu_custom_call.1} parent=11 // pred_check_branch
        %186 = sbr.rel (%p184) target = $region16
      $region15: #{tpu_custom_call.1} parent=11 // pred_region
        _
      $region16: #{tpu_custom_call.1} parent=11 // pred_fallthru
        _
      // Predicated region
      $region17: #{tpu_custom_call.1} parent=11 // pred_check
        %p187 = pneg %p80
      $region18: #{tpu_custom_call.1} parent=11 // pred_check_branch
        %189 = sbr.rel (%p187) target = $region20
      $region19: #{tpu_custom_call.1} parent=11 // pred_region
        _
      $region20: #{tpu_custom_call.1} parent=11 // pred_fallthru
        _
      // Predicated region
      $region21: #{tpu_custom_call.1} parent=11 // pred_check
        %p190 = pneg %p101
      $region22: #{tpu_custom_call.1} parent=11 // pred_check_branch
        %192 = sbr.rel (%p190) target = $region24
      $region23: #{tpu_custom_call.1} parent=11 // pred_region
        _
      $region24: #{tpu_custom_call.1} parent=11 // pred_fallthru
        _
      // Predicated region
      $region25: #{tpu_custom_call.1} parent=11 // pred_check
        %p193 = pneg %p122
      $region26: #{tpu_custom_call.1} parent=11 // pred_check_branch
        %195 = sbr.rel (%p193) target = $region28
      $region27: #{tpu_custom_call.1} parent=11 // pred_region
        _
      $region28: #{tpu_custom_call.1} parent=11 // pred_fallthru
        _
      // Predicated region
      $region29: #{tpu_custom_call.1} parent=11 // pred_check
        %p196 = pneg %p143
      $region30: #{tpu_custom_call.1} parent=11 // pred_check_branch
        %198 = sbr.rel (%p196) target = $region32
      $region31: #{tpu_custom_call.1} parent=11 // pred_region
        _
      $region32: #{tpu_custom_call.1} parent=11 // pred_fallthru
        _
    $region12: #{tpu_custom_call.1} parent=5 // pred_fallthru
      _
    %p199 = scmp.lt.s32.totalorder %s12, 2
    // Predicated region
    $region33: #{tpu_custom_call.1} parent=5 // pred_check
      %p200 = pneg %p199
    $region34: #{tpu_custom_call.1} parent=5 // pred_check_branch
      %202 = sbr.rel (%p200) target = $region36
    $region35: #{tpu_custom_call.1} parent=5 // pred_region
      // Predicated region
      $region37: #{tpu_custom_call.1} parent=35 // pred_check
        %p203 = pneg %p32
      $region38: #{tpu_custom_call.1} parent=35 // pred_check_branch
        %205 = sbr.rel (%p203) target = $region40
      $region39: #{tpu_custom_call.1} parent=35 // pred_region
        %p206 = scmp.lt.s32.totalorder %s12, 1
        %s207 = scalar_select %p206, %s12, 1
        %s208 = smul.addr %s207, 2
        %s209 = scalar_lea.vmem %s0, %s208
      $region40: #{tpu_custom_call.1} parent=35 // pred_fallthru
        _
    $region36: #{tpu_custom_call.1} parent=5 // pred_fallthru
      _
    %p210 = scmp.le.s32.totalorder 1, %s12
    %p211 = scmp.lt.s32.totalorder %s12, 3
    %p212 = pnand %p210, %p211
    %p213 = pneg %p212
    // Predicated region
    $region41: #{tpu_custom_call.1} parent=5 // pred_check
      _
    $region42: #{tpu_custom_call.1} parent=5 // pred_check_branch
      %215 = sbr.rel (%p212) target = $region44
    $region43: #{tpu_custom_call.1} parent=5 // pred_region
      %s216 = ssub.s32 %s12, 1
      %p217 = scmp.lt.s32.totalorder %s17, 1
      %s218 = scalar_select %p217, %s17, 1
      %s219 = smul.addr %s218, 2
      %s220 = scalar_lea.vmem %s0, %s219
      %p221 = pneg %p38
      %p222 = pneg %p35
      %p223 = pneg %p59
      %p224 = pneg %p56
      %p225 = pneg %p80
      %p226 = pneg %p77
      %p227 = pneg %p101
      %p228 = pneg %p98
      %p229 = pneg %p122
      %p230 = pneg %p119
      %p231 = pneg %p143
      %p232 = pneg %p140
      %p233 = pneg %p169
      %p234 = pneg %p166
      %p235 = scmp.lt.s32.totalorder %s17, 1
      %s236 = scalar_select %p235, %s17, 1
      %s237 = smul.addr %s236, 2
      %s238 = smul.addr %s237, 8
      %s239 = scalar_lea.vmem %s6, %s238
      %p240 = scmp.lt.s32.totalorder %s17, 1
      %s241 = scalar_select %p240, %s17, 1
      %s242 = smul.addr %s241, 2
      %s243 = scalar_lea.vmem %s0, %s242
      %p244 = scmp.lt.s32.totalorder %s17, 1
      %s245 = scalar_select %p244, %s17, 1
      %s246 = smul.addr %s245, 2
      %s247 = smul.addr %s246, 8
      %s248 = scalar_lea.vmem %s6, %s247
      %v249 = vld [vmem:[%s1] sm:$0xff]
      %v250 = vld [vmem:[%s1 + $0x8] sm:$0xff]
      %v251 = vld [vmem:[%s243] sm:$0x1]
      %253 = vset.pattern.permute.xlu0 0
      %254 = vperm.xlu0 %253, %v249
      %v255 = vpop.permute.xlu0 %254
      %258 = vset.pattern.permute.xlu0 0
      %259 = vperm.xlu0 %258, %v250
      %v260 = vpop.permute.xlu0 %259
      %v263 = vlaneseq
      %v264 = vshrl.u32 %v263, 7
      %v265 = vsub.s32 0, %v264
      %v266 = vrot.slane %v251, %v265
      %v268 = vmul.f32 %v255, %v266
      %v269 = vmul.f32 %v260, %v266
      %v270 = vadd.f32 %v268, 0.0
      %v271 = vadd.f32 %v269, 0.0
      %s272 = scalar_lea.vmem %s1, 16
      %v273 = vld [vmem:[%s272] sm:$0xff]
      %v274 = vld [vmem:[%s272 + $0x8] sm:$0xff]
      %v275 = vld [vmem:[%s243] sm:$0x3]
      %277 = vset.pattern.permute.xlu0 0
      %278 = vperm.xlu0 %277, %v273
      %v279 = vpop.permute.xlu0 %278
      %282 = vset.pattern.permute.xlu0 0
      %283 = vperm.xlu0 %282, %v274
      %v284 = vpop.permute.xlu0 %283
      %v287 = vlaneseq
      %v288 = vshrl.u32 %v287, 7
      %v289 = vsub.s32 0, %v288
      %v290 = vrot.slane %v275, %v289
      %v291 = vlaneseq
      %v292 = vshrl.u32 %v291, 7
      %v293 = vsub.s32 1, %v292
      %v294 = vrot.slane %v275, %v293
      %v297 = vmul.f32 %v279, %v290
      %v298 = vmul.f32 %v279, %v294
      %v299 = vmul.f32 %v284, %v290
      %v300 = vmul.f32 %v284, %v294
      %305 = vrot.lane.b32.xlu0 %v297, 127
      %v306 = vpop.permute.xlu0 %305
      %307 = vrot.lane.b32.xlu0 %v298, 127
      %v308 = vpop.permute.xlu0 %307
      %309 = vrot.lane.b32.xlu0 %v299, 127
      %v310 = vpop.permute.xlu0 %309
      %311 = vrot.lane.b32.xlu0 %v300, 127
      %v312 = vpop.permute.xlu0 %311
      %vm313 = vcmask 1039360
      %v314 = vsel %vm313, %v306, %v308
      %v315 = vsel %vm313, %v310, %v312
      %v318 = vadd.f32 %v270, %v314
      %v319 = vadd.f32 %v271, %v315
      %s320 = scalar_lea.vmem %s1, 32
      %v321 = vld [vmem:[%s320] sm:$0xff]
      %v322 = vld [vmem:[%s320 + $0x8] sm:$0xff]
      %324 = vset.pattern.permute.xlu0 0
      %325 = vperm.xlu0 %324, %v321
      %v326 = vpop.permute.xlu0 %325
      %329 = vset.pattern.permute.xlu0 0
      %330 = vperm.xlu0 %329, %v322
      %v331 = vpop.permute.xlu0 %330
      %v333 = vmul.f32 %v326, %v290
      %v334 = vmul.f32 %v326, %v294
      %v335 = vmul.f32 %v331, %v290
      %v336 = vmul.f32 %v331, %v294
      %341 = vrot.lane.b32.xlu0 %v333, 126
      %v342 = vpop.permute.xlu0 %341
      %343 = vrot.lane.b32.xlu0 %v334, 126
      %v344 = vpop.permute.xlu0 %343
      %345 = vrot.lane.b32.xlu0 %v335, 126
      %v346 = vpop.permute.xlu0 %345
      %347 = vrot.lane.b32.xlu0 %v336, 126
      %v348 = vpop.permute.xlu0 %347
      %vm349 = vcmask 1031168
      %v350 = vsel %vm349, %v342, %v344
      %v351 = vsel %vm349, %v346, %v348
      %v354 = vadd.f32 %v318, %v350
      %v355 = vadd.f32 %v319, %v351
      %s356 = scalar_lea.vmem %s1, 48
      %v357 = vld [vmem:[%s356] sm:$0xff]
      %v358 = vld [vmem:[%s356 + $0x8] sm:$0xff]
      %360 = vset.pattern.permute.xlu0 0
      %361 = vperm.xlu0 %360, %v357
      %v362 = vpop.permute.xlu0 %361
      %365 = vset.pattern.permute.xlu0 0
      %366 = vperm.xlu0 %365, %v358
      %v367 = vpop.permute.xlu0 %366
      %v369 = vmul.f32 %v362, %v290
      %v370 = vmul.f32 %v362, %v294
      %v371 = vmul.f32 %v367, %v290
      %v372 = vmul.f32 %v367, %v294
      %377 = vrot.lane.b32.xlu0 %v369, 125
      %v378 = vpop.permute.xlu0 %377
      %379 = vrot.lane.b32.xlu0 %v370, 125
      %v380 = vpop.permute.xlu0 %379
      %381 = vrot.lane.b32.xlu0 %v371, 125
      %v382 = vpop.permute.xlu0 %381
      %383 = vrot.lane.b32.xlu0 %v372, 125
      %v384 = vpop.permute.xlu0 %383
      %vm385 = vcmask 1022976
      %v386 = vsel %vm385, %v378, %v380
      %v387 = vsel %vm385, %v382, %v384
      %v390 = vadd.f32 %v354, %v386
      %v391 = vadd.f32 %v355, %v387
      %s392 = scalar_lea.vmem %s1, 64
      %v393 = vld [vmem:[%s392] sm:$0xff]
      %v394 = vld [vmem:[%s392 + $0x8] sm:$0xff]
      %396 = vset.pattern.permute.xlu0 0
      %397 = vperm.xlu0 %396, %v393
      %v398 = vpop.permute.xlu0 %397
      %401 = vset.pattern.permute.xlu0 0
      %402 = vperm.xlu0 %401, %v394
      %v403 = vpop.permute.xlu0 %402
      %v405 = vmul.f32 %v398, %v290
      %v406 = vmul.f32 %v398, %v294
      %v407 = vmul.f32 %v403, %v290
      %v408 = vmul.f32 %v403, %v294
      %413 = vrot.lane.b32.xlu0 %v405, 124
      %v414 = vpop.permute.xlu0 %413
      %415 = vrot.lane.b32.xlu0 %v406, 124
      %v416 = vpop.permute.xlu0 %415
      %417 = vrot.lane.b32.xlu0 %v407, 124
      %v418 = vpop.permute.xlu0 %417
      %419 = vrot.lane.b32.xlu0 %v408, 124
      %v420 = vpop.permute.xlu0 %419
      %vm421 = vcmask 1014784
      %v422 = vsel %vm421, %v414, %v416
      %v423 = vsel %vm421, %v418, %v420
      %v426 = vadd.f32 %v390, %v422
      %v427 = vadd.f32 %v391, %v423
      %s428 = scalar_lea.vmem %s1, 80
      %v429 = vld [vmem:[%s428] sm:$0xff]
      %v430 = vld [vmem:[%s428 + $0x8] sm:$0xff]
      %432 = vset.pattern.permute.xlu0 0
      %433 = vperm.xlu0 %432, %v429
      %v434 = vpop.permute.xlu0 %433
      %437 = vset.pattern.permute.xlu0 0
      %438 = vperm.xlu0 %437, %v430
      %v439 = vpop.permute.xlu0 %438
      %v441 = vmul.f32 %v434, %v290
      %v442 = vmul.f32 %v434, %v294
      %v443 = vmul.f32 %v439, %v290
      %v444 = vmul.f32 %v439, %v294
      %449 = vrot.lane.b32.xlu0 %v441, 123
      %v450 = vpop.permute.xlu0 %449
      %451 = vrot.lane.b32.xlu0 %v442, 123
      %v452 = vpop.permute.xlu0 %451
      %453 = vrot.lane.b32.xlu0 %v443, 123
      %v454 = vpop.permute.xlu0 %453
      %455 = vrot.lane.b32.xlu0 %v444, 123
      %v456 = vpop.permute.xlu0 %455
      %vm457 = vcmask 1006592
      %v458 = vsel %vm457, %v450, %v452
      %v459 = vsel %vm457, %v454, %v456
      %v462 = vadd.f32 %v426, %v458
      %v463 = vadd.f32 %v427, %v459
      %s464 = scalar_lea.vmem %s1, 96
      %v465 = vld [vmem:[%s464] sm:$0xff]
      %v466 = vld [vmem:[%s464 + $0x8] sm:$0xff]
      %468 = vset.pattern.permute.xlu0 0
      %469 = vperm.xlu0 %468, %v465
      %v470 = vpop.permute.xlu0 %469
      %473 = vset.pattern.permute.xlu0 0
      %474 = vperm.xlu0 %473, %v466
      %v475 = vpop.permute.xlu0 %474
      %v477 = vmul.f32 %v470, %v290
      %v478 = vmul.f32 %v470, %v294
      %v479 = vmul.f32 %v475, %v290
      %v480 = vmul.f32 %v475, %v294
      %485 = vrot.lane.b32.xlu0 %v477, 122
      %v486 = vpop.permute.xlu0 %485
      %487 = vrot.lane.b32.xlu0 %v478, 122
      %v488 = vpop.permute.xlu0 %487
      %489 = vrot.lane.b32.xlu0 %v479, 122
      %v490 = vpop.permute.xlu0 %489
      %491 = vrot.lane.b32.xlu0 %v480, 122
      %v492 = vpop.permute.xlu0 %491
      %vm493 = vcmask 998400
      %v494 = vsel %vm493, %v486, %v488
      %v495 = vsel %vm493, %v490, %v492
      %v498 = vadd.f32 %v462, %v494
      %v499 = vadd.f32 %v463, %v495
      %s500 = scalar_lea.vmem %s1, 112
      %v501 = vld [vmem:[%s500] sm:$0xff]
      %v502 = vld [vmem:[%s500 + $0x8] sm:$0xff]
      %504 = vset.pattern.permute.xlu0 0
      %505 = vperm.xlu0 %504, %v501
      %v506 = vpop.permute.xlu0 %505
      %509 = vset.pattern.permute.xlu0 0
      %510 = vperm.xlu0 %509, %v502
      %v511 = vpop.permute.xlu0 %510
      %v513 = vmul.f32 %v506, %v290
      %v514 = vmul.f32 %v506, %v294
      %v515 = vmul.f32 %v511, %v290
      %v516 = vmul.f32 %v511, %v294
      %521 = vrot.lane.b32.xlu0 %v513, 121
      %v522 = vpop.permute.xlu0 %521
      %523 = vrot.lane.b32.xlu0 %v514, 121
      %v524 = vpop.permute.xlu0 %523
      %525 = vrot.lane.b32.xlu0 %v515, 121
      %v526 = vpop.permute.xlu0 %525
      %527 = vrot.lane.b32.xlu0 %v516, 121
      %v528 = vpop.permute.xlu0 %527
      %vm529 = vcmask 990208
      %v530 = vsel %vm529, %v522, %v524
      %v531 = vsel %vm529, %v526, %v528
      %v534 = vadd.f32 %v498, %v530
      %v535 = vadd.f32 %v499, %v531
      %s536 = scalar_lea.vmem %s1, 128
      %v537 = vld [vmem:[%s536] sm:$0xff]
      %v538 = vld [vmem:[%s536 + $0x8] sm:$0xff]
      %540 = vset.pattern.permute.xlu0 0
      %541 = vperm.xlu0 %540, %v537
      %v542 = vpop.permute.xlu0 %541
      %545 = vset.pattern.permute.xlu0 0
      %546 = vperm.xlu0 %545, %v538
      %v547 = vpop.permute.xlu0 %546
      %v549 = vmul.f32 %v542, %v290
      %v550 = vmul.f32 %v542, %v294
      %v551 = vmul.f32 %v547, %v290
      %v552 = vmul.f32 %v547, %v294
      %557 = vrot.lane.b32.xlu0 %v549, 120
      %v558 = vpop.permute.xlu0 %557
      %559 = vrot.lane.b32.xlu0 %v550, 120
      %v560 = vpop.permute.xlu0 %559
      %561 = vrot.lane.b32.xlu0 %v551, 120
      %v562 = vpop.permute.xlu0 %561
      %563 = vrot.lane.b32.xlu0 %v552, 120
      %v564 = vpop.permute.xlu0 %563
      %vm565 = vcmask 982016
      %v566 = vsel %vm565, %v558, %v560
      %v567 = vsel %vm565, %v562, %v564
      %v570 = vadd.f32 %v534, %v566
      %v571 = vadd.f32 %v535, %v567
      %s572 = scalar_lea.vmem %s1, 144
      %v573 = vld [vmem:[%s572] sm:$0xff]
      %v574 = vld [vmem:[%s572 + $0x8] sm:$0xff]
      %576 = vset.pattern.permute.xlu0 0
      %577 = vperm.xlu0 %576, %v573
      %v578 = vpop.permute.xlu0 %577
      %581 = vset.pattern.permute.xlu0 0
      %582 = vperm.xlu0 %581, %v574
      %v583 = vpop.permute.xlu0 %582
      %v585 = vmul.f32 %v578, %v290
      %v586 = vmul.f32 %v578, %v294
      %v587 = vmul.f32 %v583, %v290
      %v588 = vmul.f32 %v583, %v294
      %593 = vrot.lane.b32.xlu0 %v585, 119
      %v594 = vpop.permute.xlu0 %593
      %595 = vrot.lane.b32.xlu0 %v586, 119
      %v596 = vpop.permute.xlu0 %595
      %597 = vrot.lane.b32.xlu0 %v587, 119
      %v598 = vpop.permute.xlu0 %597
      %599 = vrot.lane.b32.xlu0 %v588, 119
      %v600 = vpop.permute.xlu0 %599
      %vm601 = vcmask 973824
      %v602 = vsel %vm601, %v594, %v596
      %v603 = vsel %vm601, %v598, %v600
      %v606 = vadd.f32 %v570, %v602
      %v607 = vadd.f32 %v571, %v603
      %s608 = scalar_lea.vmem %s1, 160
      %v609 = vld [vmem:[%s608] sm:$0xff]
      %v610 = vld [vmem:[%s608 + $0x8] sm:$0xff]
      %612 = vset.pattern.permute.xlu0 0
      %613 = vperm.xlu0 %612, %v609
      %v614 = vpop.permute.xlu0 %613
      %617 = vset.pattern.permute.xlu0 0
      %618 = vperm.xlu0 %617, %v610
      %v619 = vpop.permute.xlu0 %618
      %v621 = vmul.f32 %v614, %v290
      %v622 = vmul.f32 %v614, %v294
      %v623 = vmul.f32 %v619, %v290
      %v624 = vmul.f32 %v619, %v294
      %629 = vrot.lane.b32.xlu0 %v621, 118
      %v630 = vpop.permute.xlu0 %629
      %631 = vrot.lane.b32.xlu0 %v622, 118
      %v632 = vpop.permute.xlu0 %631
      %633 = vrot.lane.b32.xlu0 %v623, 118
      %v634 = vpop.permute.xlu0 %633
      %635 = vrot.lane.b32.xlu0 %v624, 118
      %v636 = vpop.permute.xlu0 %635
      %vm637 = vcmask 965632
      %v638 = vsel %vm637, %v630, %v632
      %v639 = vsel %vm637, %v634, %v636
      %v642 = vadd.f32 %v606, %v638
      %v643 = vadd.f32 %v607, %v639
      %s644 = scalar_lea.vmem %s1, 176
      %v645 = vld [vmem:[%s644] sm:$0xff]
      %v646 = vld [vmem:[%s644 + $0x8] sm:$0xff]
      %648 = vset.pattern.permute.xlu0 0
      %649 = vperm.xlu0 %648, %v645
      %v650 = vpop.permute.xlu0 %649
      %653 = vset.pattern.permute.xlu0 0
      %654 = vperm.xlu0 %653, %v646
      %v655 = vpop.permute.xlu0 %654
      %v657 = vmul.f32 %v650, %v290
      %v658 = vmul.f32 %v650, %v294
      %v659 = vmul.f32 %v655, %v290
      %v660 = vmul.f32 %v655, %v294
      %665 = vrot.lane.b32.xlu0 %v657, 117
      %v666 = vpop.permute.xlu0 %665
      %667 = vrot.lane.b32.xlu0 %v658, 117
      %v668 = vpop.permute.xlu0 %667
      %669 = vrot.lane.b32.xlu0 %v659, 117
      %v670 = vpop.permute.xlu0 %669
      %671 = vrot.lane.b32.xlu0 %v660, 117
      %v672 = vpop.permute.xlu0 %671
      %vm673 = vcmask 957440
      %v674 = vsel %vm673, %v666, %v668
      %v675 = vsel %vm673, %v670, %v672
      %v678 = vadd.f32 %v642, %v674
      %v679 = vadd.f32 %v643, %v675
      %s680 = scalar_lea.vmem %s1, 192
      %v681 = vld [vmem:[%s680] sm:$0xff]
      %v682 = vld [vmem:[%s680 + $0x8] sm:$0xff]
      %684 = vset.pattern.permute.xlu0 0
      %685 = vperm.xlu0 %684, %v681
      %v686 = vpop.permute.xlu0 %685
      %689 = vset.pattern.permute.xlu0 0
      %690 = vperm.xlu0 %689, %v682
      %v691 = vpop.permute.xlu0 %690
      %v693 = vmul.f32 %v686, %v290
      %v694 = vmul.f32 %v686, %v294
      %v695 = vmul.f32 %v691, %v290
      %v696 = vmul.f32 %v691, %v294
      %701 = vrot.lane.b32.xlu0 %v693, 116
      %v702 = vpop.permute.xlu0 %701
      %703 = vrot.lane.b32.xlu0 %v694, 116
      %v704 = vpop.permute.xlu0 %703
      %705 = vrot.lane.b32.xlu0 %v695, 116
      %v706 = vpop.permute.xlu0 %705
      %707 = vrot.lane.b32.xlu0 %v696, 116
      %v708 = vpop.permute.xlu0 %707
      %vm709 = vcmask 949248
      %v710 = vsel %vm709, %v702, %v704
      %v711 = vsel %vm709, %v706, %v708
      %v714 = vadd.f32 %v678, %v710
      %v715 = vadd.f32 %v679, %v711
      %s716 = scalar_lea.vmem %s1, 208
      %v717 = vld [vmem:[%s716] sm:$0xff]
      %v718 = vld [vmem:[%s716 + $0x8] sm:$0xff]
      %720 = vset.pattern.permute.xlu0 0
      %721 = vperm.xlu0 %720, %v717
      %v722 = vpop.permute.xlu0 %721
      %725 = vset.pattern.permute.xlu0 0
      %726 = vperm.xlu0 %725, %v718
      %v727 = vpop.permute.xlu0 %726
      %v729 = vmul.f32 %v722, %v290
      %v730 = vmul.f32 %v722, %v294
      %v731 = vmul.f32 %v727, %v290
      %v732 = vmul.f32 %v727, %v294
      %737 = vrot.lane.b32.xlu0 %v729, 115
      %v738 = vpop.permute.xlu0 %737
      %739 = vrot.lane.b32.xlu0 %v730, 115
      %v740 = vpop.permute.xlu0 %739
      %741 = vrot.lane.b32.xlu0 %v731, 115
      %v742 = vpop.permute.xlu0 %741
      %743 = vrot.lane.b32.xlu0 %v732, 115
      %v744 = vpop.permute.xlu0 %743
      %vm745 = vcmask 941056
      %v746 = vsel %vm745, %v738, %v740
      %v747 = vsel %vm745, %v742, %v744
      %v750 = vadd.f32 %v714, %v746
      %v751 = vadd.f32 %v715, %v747
      %s752 = scalar_lea.vmem %s1, 224
      %v753 = vld [vmem:[%s752] sm:$0xff]
      %v754 = vld [vmem:[%s752 + $0x8] sm:$0xff]
      %756 = vset.pattern.permute.xlu0 0
      %757 = vperm.xlu0 %756, %v753
      %v758 = vpop.permute.xlu0 %757
      %761 = vset.pattern.permute.xlu0 0
      %762 = vperm.xlu0 %761, %v754
      %v763 = vpop.permute.xlu0 %762
      %v765 = vmul.f32 %v758, %v290
      %v766 = vmul.f32 %v758, %v294
      %v767 = vmul.f32 %v763, %v290
      %v768 = vmul.f32 %v763, %v294
      %773 = vrot.lane.b32.xlu0 %v765, 114
      %v774 = vpop.permute.xlu0 %773
      %775 = vrot.lane.b32.xlu0 %v766, 114
      %v776 = vpop.permute.xlu0 %775
      %777 = vrot.lane.b32.xlu0 %v767, 114
      %v778 = vpop.permute.xlu0 %777
      %779 = vrot.lane.b32.xlu0 %v768, 114
      %v780 = vpop.permute.xlu0 %779
      %vm781 = vcmask 932864
      %v782 = vsel %vm781, %v774, %v776
      %v783 = vsel %vm781, %v778, %v780
      %v786 = vadd.f32 %v750, %v782
      %v787 = vadd.f32 %v751, %v783
      %s788 = scalar_lea.vmem %s1, 240
      %v789 = vld [vmem:[%s788] sm:$0xff]
      %v790 = vld [vmem:[%s788 + $0x8] sm:$0xff]
      %792 = vset.pattern.permute.xlu0 0
      %793 = vperm.xlu0 %792, %v789
      %v794 = vpop.permute.xlu0 %793
      %797 = vset.pattern.permute.xlu0 0
      %798 = vperm.xlu0 %797, %v790
      %v799 = vpop.permute.xlu0 %798
      %v801 = vmul.f32 %v794, %v290
      %v802 = vmul.f32 %v794, %v294
      %v803 = vmul.f32 %v799, %v290
      %v804 = vmul.f32 %v799, %v294
      %809 = vrot.lane.b32.xlu0 %v801, 113
      %v810 = vpop.permute.xlu0 %809
      %811 = vrot.lane.b32.xlu0 %v802, 113
      %v812 = vpop.permute.xlu0 %811
      %813 = vrot.lane.b32.xlu0 %v803, 113
      %v814 = vpop.permute.xlu0 %813
      %815 = vrot.lane.b32.xlu0 %v804, 113
      %v816 = vpop.permute.xlu0 %815
      %vm817 = vcmask 924672
      %v818 = vsel %vm817, %v810, %v812
      %v819 = vsel %vm817, %v814, %v816
      %v822 = vadd.f32 %v786, %v818
      %v823 = vadd.f32 %v787, %v819
      %s824 = scalar_lea.vmem %s1, 256
      %v825 = vld [vmem:[%s824] sm:$0xff]
      %v826 = vld [vmem:[%s824 + $0x8] sm:$0xff]
      %828 = vset.pattern.permute.xlu0 0
      %829 = vperm.xlu0 %828, %v825
      %v830 = vpop.permute.xlu0 %829
      %833 = vset.pattern.permute.xlu0 0
      %834 = vperm.xlu0 %833, %v826
      %v835 = vpop.permute.xlu0 %834
      %v837 = vmul.f32 %v830, %v290
      %v838 = vmul.f32 %v830, %v294
      %v839 = vmul.f32 %v835, %v290
      %v840 = vmul.f32 %v835, %v294
      %845 = vrot.lane.b32.xlu0 %v837, 112
      %v846 = vpop.permute.xlu0 %845
      %847 = vrot.lane.b32.xlu0 %v838, 112
      %v848 = vpop.permute.xlu0 %847
      %849 = vrot.lane.b32.xlu0 %v839, 112
      %v850 = vpop.permute.xlu0 %849
      %851 = vrot.lane.b32.xlu0 %v840, 112
      %v852 = vpop.permute.xlu0 %851
      %vm853 = vcmask 916480
      %v854 = vsel %vm853, %v846, %v848
      %v855 = vsel %vm853, %v850, %v852
      %v858 = vadd.f32 %v822, %v854
      %v859 = vadd.f32 %v823, %v855
      %s860 = scalar_lea.vmem %s1, 272
      %v861 = vld [vmem:[%s860] sm:$0xff]
      %v862 = vld [vmem:[%s860 + $0x8] sm:$0xff]
      %864 = vset.pattern.permute.xlu0 0
      %865 = vperm.xlu0 %864, %v861
      %v866 = vpop.permute.xlu0 %865
      %869 = vset.pattern.permute.xlu0 0
      %870 = vperm.xlu0 %869, %v862
      %v871 = vpop.permute.xlu0 %870
      %v873 = vmul.f32 %v866, %v290
      %v874 = vmul.f32 %v866, %v294
      %v875 = vmul.f32 %v871, %v290
      %v876 = vmul.f32 %v871, %v294
      %881 = vrot.lane.b32.xlu0 %v873, 111
      %v882 = vpop.permute.xlu0 %881
      %883 = vrot.lane.b32.xlu0 %v874, 111
      %v884 = vpop.permute.xlu0 %883
      %885 = vrot.lane.b32.xlu0 %v875, 111
      %v886 = vpop.permute.xlu0 %885
      %887 = vrot.lane.b32.xlu0 %v876, 111
      %v888 = vpop.permute.xlu0 %887
      %vm889 = vcmask 908288
      %v890 = vsel %vm889, %v882, %v884
      %v891 = vsel %vm889, %v886, %v888
      %v894 = vadd.f32 %v858, %v890
      %v895 = vadd.f32 %v859, %v891
      %s896 = scalar_lea.vmem %s1, 288
      %v897 = vld [vmem:[%s896] sm:$0xff]
      %v898 = vld [vmem:[%s896 + $0x8] sm:$0xff]
      %900 = vset.pattern.permute.xlu0 0
      %901 = vperm.xlu0 %900, %v897
      %v902 = vpop.permute.xlu0 %901
      %905 = vset.pattern.permute.xlu0 0
      %906 = vperm.xlu0 %905, %v898
      %v907 = vpop.permute.xlu0 %906
      %v909 = vmul.f32 %v902, %v290
      %v910 = vmul.f32 %v902, %v294
      %v911 = vmul.f32 %v907, %v290
      %v912 = vmul.f32 %v907, %v294
      %917 = vrot.lane.b32.xlu0 %v909, 110
      %v918 = vpop.permute.xlu0 %917
      %919 = vrot.lane.b32.xlu0 %v910, 110
      %v920 = vpop.permute.xlu0 %919
      %921 = vrot.lane.b32.xlu0 %v911, 110
      %v922 = vpop.permute.xlu0 %921
      %923 = vrot.lane.b32.xlu0 %v912, 110
      %v924 = vpop.permute.xlu0 %923
      %vm925 = vcmask 900096
      %v926 = vsel %vm925, %v918, %v920
      %v927 = vsel %vm925, %v922, %v924
      %v930 = vadd.f32 %v894, %v926
      %v931 = vadd.f32 %v895, %v927
      %s932 = scalar_lea.vmem %s1, 304
      %v933 = vld [vmem:[%s932] sm:$0xff]
      %v934 = vld [vmem:[%s932 + $0x8] sm:$0xff]
      %936 = vset.pattern.permute.xlu0 0
      %937 = vperm.xlu0 %936, %v933
      %v938 = vpop.permute.xlu0 %937
      %941 = vset.pattern.permute.xlu0 0
      %942 = vperm.xlu0 %941, %v934
      %v943 = vpop.permute.xlu0 %942
      %v945 = vmul.f32 %v938, %v290
      %v946 = vmul.f32 %v938, %v294
      %v947 = vmul.f32 %v943, %v290
      %v948 = vmul.f32 %v943, %v294
      %953 = vrot.lane.b32.xlu0 %v945, 109
      %v954 = vpop.permute.xlu0 %953
      %955 = vrot.lane.b32.xlu0 %v946, 109
      %v956 = vpop.permute.xlu0 %955
      %957 = vrot.lane.b32.xlu0 %v947, 109
      %v958 = vpop.permute.xlu0 %957
      %959 = vrot.lane.b32.xlu0 %v948, 109
      %v960 = vpop.permute.xlu0 %959
      %vm961 = vcmask 891904
      %v962 = vsel %vm961, %v954, %v956
      %v963 = vsel %vm961, %v958, %v960
      %v966 = vadd.f32 %v930, %v962
      %v967 = vadd.f32 %v931, %v963
      %s968 = scalar_lea.vmem %s1, 320
      %v969 = vld [vmem:[%s968] sm:$0xff]
      %v970 = vld [vmem:[%s968 + $0x8] sm:$0xff]
      %972 = vset.pattern.permute.xlu0 0
      %973 = vperm.xlu0 %972, %v969
      %v974 = vpop.permute.xlu0 %973
      %977 = vset.pattern.permute.xlu0 0
      %978 = vperm.xlu0 %977, %v970
      %v979 = vpop.permute.xlu0 %978
      %v981 = vmul.f32 %v974, %v290
      %v982 = vmul.f32 %v974, %v294
      %v983 = vmul.f32 %v979, %v290
      %v984 = vmul.f32 %v979, %v294
      %989 = vrot.lane.b32.xlu0 %v981, 108
      %v990 = vpop.permute.xlu0 %989
      %991 = vrot.lane.b32.xlu0 %v982, 108
      %v992 = vpop.permute.xlu0 %991
      %993 = vrot.lane.b32.xlu0 %v983, 108
      %v994 = vpop.permute.xlu0 %993
      %995 = vrot.lane.b32.xlu0 %v984, 108
      %v996 = vpop.permute.xlu0 %995
      %vm997 = vcmask 883712
      %v998 = vsel %vm997, %v990, %v992
      %v999 = vsel %vm997, %v994, %v996
      %v1002 = vadd.f32 %v966, %v998
      %v1003 = vadd.f32 %v967, %v999
      %s1004 = scalar_lea.vmem %s1, 336
      %v1005 = vld [vmem:[%s1004] sm:$0xff]
      %v1006 = vld [vmem:[%s1004 + $0x8] sm:$0xff]
      %1008 = vset.pattern.permute.xlu0 0
      %1009 = vperm.xlu0 %1008, %v1005
      %v1010 = vpop.permute.xlu0 %1009
      %1013 = vset.pattern.permute.xlu0 0
      %1014 = vperm.xlu0 %1013, %v1006
      %v1015 = vpop.permute.xlu0 %1014
      %v1017 = vmul.f32 %v1010, %v290
      %v1018 = vmul.f32 %v1010, %v294
      %v1019 = vmul.f32 %v1015, %v290
      %v1020 = vmul.f32 %v1015, %v294
      %1025 = vrot.lane.b32.xlu0 %v1017, 107
      %v1026 = vpop.permute.xlu0 %1025
      %1027 = vrot.lane.b32.xlu0 %v1018, 107
      %v1028 = vpop.permute.xlu0 %1027
      %1029 = vrot.lane.b32.xlu0 %v1019, 107
      %v1030 = vpop.permute.xlu0 %1029
      %1031 = vrot.lane.b32.xlu0 %v1020, 107
      %v1032 = vpop.permute.xlu0 %1031
      %vm1033 = vcmask 875520
      %v1034 = vsel %vm1033, %v1026, %v1028
      %v1035 = vsel %vm1033, %v1030, %v1032
      %v1038 = vadd.f32 %v1002, %v1034
      %v1039 = vadd.f32 %v1003, %v1035
      %s1040 = scalar_lea.vmem %s1, 352
      %v1041 = vld [vmem:[%s1040] sm:$0xff]
      %v1042 = vld [vmem:[%s1040 + $0x8] sm:$0xff]
      %1044 = vset.pattern.permute.xlu0 0
      %1045 = vperm.xlu0 %1044, %v1041
      %v1046 = vpop.permute.xlu0 %1045
      %1049 = vset.pattern.permute.xlu0 0
      %1050 = vperm.xlu0 %1049, %v1042
      %v1051 = vpop.permute.xlu0 %1050
      %v1053 = vmul.f32 %v1046, %v290
      %v1054 = vmul.f32 %v1046, %v294
      %v1055 = vmul.f32 %v1051, %v290
      %v1056 = vmul.f32 %v1051, %v294
      %1061 = vrot.lane.b32.xlu0 %v1053, 106
      %v1062 = vpop.permute.xlu0 %1061
      %1063 = vrot.lane.b32.xlu0 %v1054, 106
      %v1064 = vpop.permute.xlu0 %1063
      %1065 = vrot.lane.b32.xlu0 %v1055, 106
      %v1066 = vpop.permute.xlu0 %1065
      %1067 = vrot.lane.b32.xlu0 %v1056, 106
      %v1068 = vpop.permute.xlu0 %1067
      %vm1069 = vcmask 867328
      %v1070 = vsel %vm1069, %v1062, %v1064
      %v1071 = vsel %vm1069, %v1066, %v1068
      %v1074 = vadd.f32 %v1038, %v1070
      %v1075 = vadd.f32 %v1039, %v1071
      %s1076 = scalar_lea.vmem %s1, 368
      %v1077 = vld [vmem:[%s1076] sm:$0xff]
      %v1078 = vld [vmem:[%s1076 + $0x8] sm:$0xff]
      %1080 = vset.pattern.permute.xlu0 0
      %1081 = vperm.xlu0 %1080, %v1077
      %v1082 = vpop.permute.xlu0 %1081
      %1085 = vset.pattern.permute.xlu0 0
      %1086 = vperm.xlu0 %1085, %v1078
      %v1087 = vpop.permute.xlu0 %1086
      %v1089 = vmul.f32 %v1082, %v290
      %v1090 = vmul.f32 %v1082, %v294
      %v1091 = vmul.f32 %v1087, %v290
      %v1092 = vmul.f32 %v1087, %v294
      %1097 = vrot.lane.b32.xlu0 %v1089, 105
      %v1098 = vpop.permute.xlu0 %1097
      %1099 = vrot.lane.b32.xlu0 %v1090, 105
      %v1100 = vpop.permute.xlu0 %1099
      %1101 = vrot.lane.b32.xlu0 %v1091, 105
      %v1102 = vpop.permute.xlu0 %1101
      %1103 = vrot.lane.b32.xlu0 %v1092, 105
      %v1104 = vpop.permute.xlu0 %1103
      %vm1105 = vcmask 859136
      %v1106 = vsel %vm1105, %v1098, %v1100
      %v1107 = vsel %vm1105, %v1102, %v1104
      %v1110 = vadd.f32 %v1074, %v1106
      %v1111 = vadd.f32 %v1075, %v1107
      %s1112 = scalar_lea.vmem %s1, 384
      %v1113 = vld [vmem:[%s1112] sm:$0xff]
      %v1114 = vld [vmem:[%s1112 + $0x8] sm:$0xff]
      %1116 = vset.pattern.permute.xlu0 0
      %1117 = vperm.xlu0 %1116, %v1113
      %v1118 = vpop.permute.xlu0 %1117
      %1121 = vset.pattern.permute.xlu0 0
      %1122 = vperm.xlu0 %1121, %v1114
      %v1123 = vpop.permute.xlu0 %1122
      %v1125 = vmul.f32 %v1118, %v290
      %v1126 = vmul.f32 %v1118, %v294
      %v1127 = vmul.f32 %v1123, %v290
      %v1128 = vmul.f32 %v1123, %v294
      %1133 = vrot.lane.b32.xlu0 %v1125, 104
      %v1134 = vpop.permute.xlu0 %1133
      %1135 = vrot.lane.b32.xlu0 %v1126, 104
      %v1136 = vpop.permute.xlu0 %1135
      %1137 = vrot.lane.b32.xlu0 %v1127, 104
      %v1138 = vpop.permute.xlu0 %1137
      %1139 = vrot.lane.b32.xlu0 %v1128, 104
      %v1140 = vpop.permute.xlu0 %1139
      %vm1141 = vcmask 850944
      %v1142 = vsel %vm1141, %v1134, %v1136
      %v1143 = vsel %vm1141, %v1138, %v1140
      %v1146 = vadd.f32 %v1110, %v1142
      %v1147 = vadd.f32 %v1111, %v1143
      %v1148 = vld [vmem:[%s5] sm:$0xff]
      %v1149 = vld [vmem:[%s5 + $0x8] sm:$0xff]
      %1151 = vset.pattern.permute.xlu0 0
      %1152 = vperm.xlu0 %1151, %v1148
      %v1153 = vpop.permute.xlu0 %1152
      %1156 = vset.pattern.permute.xlu0 0
      %1157 = vperm.xlu0 %1156, %v1149
      %v1158 = vpop.permute.xlu0 %1157
      %v1160 = vadd.f32 %v1146, %v1153
      %v1161 = vadd.f32 %v1147, %v1158
      %vm1162 = vcmp.gt.f32.partialorder %v1160, 0.0
      %vm1163 = vcmp.gt.f32.partialorder %v1161, 0.0
      %v1164 = vmin.f32 %v1160, 0.0
      %v1165 = vmin.f32 %v1161, 0.0
      %v1166 = vmul.f32 %v1164, 1.442695
      %v1167 = vpow.pop %v1166
      %v1168 = vmul.f32 %v1165, 1.442695
      %v1169 = vpow.pop %v1168
      %v1170 = vsub.f32 %v1167, 1.0
      %v1171 = vsub.f32 %v1169, 1.0
      %v1172 = vsel %vm1162, %v1160, %v1170
      %v1173 = vsel %vm1163, %v1161, %v1171
      %1174 = vst [vmem:[#allocation2] sm:$0xff] 0.0
      %1175 = vst [vmem:[#allocation2 + $0x8] sm:$0xff] 0.0
      %1176 = vst [vmem:[#allocation2 + $0x10] sm:$0xff] 0.0
      %1177 = vst [vmem:[#allocation2 + $0x18] sm:$0xff] 0.0
      %1178 = vst [vmem:[#allocation2 + $0x20] sm:$0xff] 0.0
      %1179 = vst [vmem:[#allocation2 + $0x28] sm:$0xff] 0.0
      %1180 = vst [vmem:[#allocation2 + $0x8] sm:$0xff] %v1172
      %1181 = vst [vmem:[#allocation2 + $0x20] sm:$0xff] %v1173
      %v1182 = vld [vmem:[%s2] sm:$0xff]
      %v1183 = vld [vmem:[%s2 + $0x8] sm:$0xff]
      %v1184 = vld [vmem:[#allocation2] sm:$0xff]
      %v1185 = vld [vmem:[#allocation2 + $0x8] sm:$0xff]
      %v1186 = vld [vmem:[#allocation2 + $0x18] sm:$0xff]
      %v1187 = vld [vmem:[#allocation2 + $0x20] sm:$0xff]
      %1189 = vset.pattern.permute.xlu0 0
      %1190 = vperm.xlu0 %1189, %v1182
      %v1191 = vpop.permute.xlu0 %1190
      %1194 = vset.pattern.permute.xlu0 0
      %1195 = vperm.xlu0 %1194, %v1183
      %v1196 = vpop.permute.xlu0 %1195
      %v1198 = vmul.f32 %v1191, %v1184
      %v1199 = vmul.f32 %v1191, %v1185
      %v1200 = vmul.f32 %v1196, %v1186
      %v1201 = vmul.f32 %v1196, %v1187
      %v1202 = vadd.f32 %v1198, 0.0
      %v1203 = vadd.f32 %v1199, 0.0
      %v1204 = vadd.f32 %v1200, 0.0
      %v1205 = vadd.f32 %v1201, 0.0
      %s1206 = scalar_lea.vmem %s2, 16
      %v1207 = vld [vmem:[%s1206] sm:$0xff]
      %v1208 = vld [vmem:[%s1206 + $0x8] sm:$0xff]
      %1210 = vset.pattern.permute.xlu0 0
      %1211 = vperm.xlu0 %1210, %v1207
      %v1212 = vpop.permute.xlu0 %1211
      %1215 = vset.pattern.permute.xlu0 0
      %1216 = vperm.xlu0 %1215, %v1208
      %v1217 = vpop.permute.xlu0 %1216
      %v1219 = vmul.f32 %v1212, %v1185
      %v1220 = vmul.f32 %v1217, %v1187
      %1223 = vrot.lane.b32.xlu0 %v1219, 127
      %v1224 = vpop.permute.xlu0 %1223
      %1225 = vrot.lane.b32.xlu0 %v1220, 127
      %v1226 = vpop.permute.xlu0 %1225
      %v1229 = vadd.f32 %v1202, %v1224
      %v1230 = vadd.f32 %v1203, %v1224
      %v1231 = vadd.f32 %v1204, %v1226
      %v1232 = vadd.f32 %v1205, %v1226
      %s1233 = scalar_lea.vmem %s2, 32
      %v1234 = vld [vmem:[%s1233] sm:$0xff]
      %v1235 = vld [vmem:[%s1233 + $0x8] sm:$0xff]
      %v1236 = vld [vmem:[#allocation2 + $0x8] sm:$0xff]
      %v1237 = vld [vmem:[#allocation2 + $0x10] sm:$0xff]
      %v1238 = vld [vmem:[#allocation2 + $0x20] sm:$0xff]
      %v1239 = vld [vmem:[#allocation2 + $0x28] sm:$0xff]
      %1241 = vset.pattern.permute.xlu0 0
      %1242 = vperm.xlu0 %1241, %v1234
      %v1243 = vpop.permute.xlu0 %1242
      %1246 = vset.pattern.permute.xlu0 0
      %1247 = vperm.xlu0 %1246, %v1235
      %v1248 = vpop.permute.xlu0 %1247
      %v1250 = vmul.f32 %v1243, %v1236
      %v1251 = vmul.f32 %v1243, %v1237
      %v1252 = vmul.f32 %v1248, %v1238
      %v1253 = vmul.f32 %v1248, %v1239
      %1258 = vrot.lane.b32.xlu0 %v1250, 126
      %v1259 = vpop.permute.xlu0 %1258
      %1260 = vrot.lane.b32.xlu0 %v1251, 126
      %v1261 = vpop.permute.xlu0 %1260
      %1262 = vrot.lane.b32.xlu0 %v1252, 126
      %v1263 = vpop.permute.xlu0 %1262
      %1264 = vrot.lane.b32.xlu0 %v1253, 126
      %v1265 = vpop.permute.xlu0 %1264
      %v1266 = vsel %vm349, %v1259, %v1261
      %v1267 = vsel %vm349, %v1263, %v1265
      %v1272 = vadd.f32 %v1229, %v1259
      %v1273 = vadd.f32 %v1230, %v1266
      %v1274 = vadd.f32 %v1231, %v1263
      %v1275 = vadd.f32 %v1232, %v1267
      %s1276 = scalar_lea.vmem %s5, 16
      %v1277 = vld [vmem:[%s1276] sm:$0xff]
      %v1278 = vld [vmem:[%s1276 + $0x8] sm:$0xff]
      %1280 = vset.pattern.permute.xlu0 0
      %1281 = vperm.xlu0 %1280, %v1277
      %v1282 = vpop.permute.xlu0 %1281
      %1285 = vset.pattern.permute.xlu0 0
      %1286 = vperm.xlu0 %1285, %v1278
      %v1287 = vpop.permute.xlu0 %1286
      %v1289 = vadd.f32 %v1272, %v1282
      %v1290 = vadd.f32 %v1273, %v1282
      %v1291 = vadd.f32 %v1274, %v1287
      %v1292 = vadd.f32 %v1275, %v1287
      %vm1293 = vcmp.gt.f32.partialorder %v1289, 0.0
      %vm1294 = vcmp.gt.f32.partialorder %v1290, 0.0
      %vm1295 = vcmp.gt.f32.partialorder %v1291, 0.0
      %vm1296 = vcmp.gt.f32.partialorder %v1292, 0.0
      %v1297 = vmin.f32 %v1289, 0.0
      %v1298 = vmin.f32 %v1290, 0.0
      %v1299 = vmin.f32 %v1291, 0.0
      %v1300 = vmin.f32 %v1292, 0.0
      %v1301 = vmul.f32 %v1297, 1.442695
      %v1302 = vpow.pop %v1301
      %v1303 = vmul.f32 %v1298, 1.442695
      %v1304 = vpow.pop %v1303
      %v1305 = vmul.f32 %v1299, 1.442695
      %v1306 = vpow.pop %v1305
      %v1307 = vmul.f32 %v1300, 1.442695
      %v1308 = vpow.pop %v1307
      %v1309 = vsub.f32 %v1302, 1.0
      %v1310 = vsub.f32 %v1304, 1.0
      %v1311 = vsub.f32 %v1306, 1.0
      %v1312 = vsub.f32 %v1308, 1.0
      %v1313 = vsel %vm1293, %v1289, %v1309
      %v1314 = vsel %vm1294, %v1290, %v1310
      %v1315 = vsel %vm1295, %v1291, %v1311
      %v1316 = vsel %vm1296, %v1292, %v1312
      %1321 = vrot.lane.b32.xlu0 %v1313, 1
      %v1322 = vpop.permute.xlu0 %1321
      %1323 = vrot.lane.b32.xlu0 %v1314, 1
      %v1324 = vpop.permute.xlu0 %1323
      %1325 = vrot.lane.b32.xlu0 %v1315, 1
      %v1326 = vpop.permute.xlu0 %1325
      %1327 = vrot.lane.b32.xlu0 %v1316, 1
      %v1328 = vpop.permute.xlu0 %1327
      %vm1329 = vcmask 7168
      %v1330 = vsel %vm1329, %v1322, %v1324
      %v1331 = vsel %vm1329, %v1326, %v1328
      %1334 = vst [vmem:[#allocation2 + $0x8] sm:$0xff] %v1330
      %1335 = vst [vmem:[#allocation2 + $0x20] sm:$0xff] %v1331
      %v1336 = vld [vmem:[%s3] sm:$0xff]
      %v1337 = vld [vmem:[%s3 + $0x8] sm:$0xff]
      %v1338 = vld [vmem:[#allocation2] sm:$0xff]
      %v1339 = vld [vmem:[#allocation2 + $0x8] sm:$0xff]
      %v1340 = vld [vmem:[#allocation2 + $0x18] sm:$0xff]
      %v1341 = vld [vmem:[#allocation2 + $0x20] sm:$0xff]
      %1343 = vset.pattern.permute.xlu0 0
      %1344 = vperm.xlu0 %1343, %v1336
      %v1345 = vpop.permute.xlu0 %1344
      %1348 = vset.pattern.permute.xlu0 0
      %1349 = vperm.xlu0 %1348, %v1337
      %v1350 = vpop.permute.xlu0 %1349
      %v1352 = vmul.f32 %v1345, %v1338
      %v1353 = vmul.f32 %v1345, %v1339
      %v1354 = vmul.f32 %v1350, %v1340
      %v1355 = vmul.f32 %v1350, %v1341
      %v1356 = vadd.f32 %v1352, 0.0
      %v1357 = vadd.f32 %v1353, 0.0
      %v1358 = vadd.f32 %v1354, 0.0
      %v1359 = vadd.f32 %v1355, 0.0
      %s1360 = scalar_lea.vmem %s3, 16
      %v1361 = vld [vmem:[%s1360] sm:$0xff]
      %v1362 = vld [vmem:[%s1360 + $0x8] sm:$0xff]
      %1364 = vset.pattern.permute.xlu0 0
      %1365 = vperm.xlu0 %1364, %v1361
      %v1366 = vpop.permute.xlu0 %1365
      %1369 = vset.pattern.permute.xlu0 0
      %1370 = vperm.xlu0 %1369, %v1362
      %v1371 = vpop.permute.xlu0 %1370
      %v1373 = vmul.f32 %v1366, %v1339
      %v1374 = vmul.f32 %v1371, %v1341
      %1377 = vrot.lane.b32.xlu0 %v1373, 127
      %v1378 = vpop.permute.xlu0 %1377
      %1379 = vrot.lane.b32.xlu0 %v1374, 127
      %v1380 = vpop.permute.xlu0 %1379
      %v1383 = vadd.f32 %v1356, %v1378
      %v1384 = vadd.f32 %v1357, %v1378
      %v1385 = vadd.f32 %v1358, %v1380
      %v1386 = vadd.f32 %v1359, %v1380
      %s1387 = scalar_lea.vmem %s3, 32
      %v1388 = vld [vmem:[%s1387] sm:$0xff]
      %v1389 = vld [vmem:[%s1387 + $0x8] sm:$0xff]
      %v1390 = vld [vmem:[#allocation2 + $0x8] sm:$0xff]
      %v1391 = vld [vmem:[#allocation2 + $0x10] sm:$0xff]
      %v1392 = vld [vmem:[#allocation2 + $0x20] sm:$0xff]
      %v1393 = vld [vmem:[#allocation2 + $0x28] sm:$0xff]
      %1395 = vset.pattern.permute.xlu0 0
      %1396 = vperm.xlu0 %1395, %v1388
      %v1397 = vpop.permute.xlu0 %1396
      %1400 = vset.pattern.permute.xlu0 0
      %1401 = vperm.xlu0 %1400, %v1389
      %v1402 = vpop.permute.xlu0 %1401
      %v1404 = vmul.f32 %v1397, %v1390
      %v1405 = vmul.f32 %v1397, %v1391
      %v1406 = vmul.f32 %v1402, %v1392
      %v1407 = vmul.f32 %v1402, %v1393
      %1412 = vrot.lane.b32.xlu0 %v1404, 126
      %v1413 = vpop.permute.xlu0 %1412
      %1414 = vrot.lane.b32.xlu0 %v1405, 126
      %v1415 = vpop.permute.xlu0 %1414
      %1416 = vrot.lane.b32.xlu0 %v1406, 126
      %v1417 = vpop.permute.xlu0 %1416
      %1418 = vrot.lane.b32.xlu0 %v1407, 126
      %v1419 = vpop.permute.xlu0 %1418
      %v1420 = vsel %vm349, %v1413, %v1415
      %v1421 = vsel %vm349, %v1417, %v1419
      %v1426 = vadd.f32 %v1383, %v1413
      %v1427 = vadd.f32 %v1384, %v1420
      %v1428 = vadd.f32 %v1385, %v1417
      %v1429 = vadd.f32 %v1386, %v1421
      %v1430 = vld [vmem:[%s4] sm:$0xff]
      %v1431 = vld [vmem:[%s4 + $0x8] sm:$0xff]
      %s1432 = scalar_lea.vmem %s5, 32
      %v1433 = vld [vmem:[%s1432] sm:$0xff]
      %v1434 = vld [vmem:[%s1432 + $0x8] sm:$0xff]
      %1436 = vset.pattern.permute.xlu0 0
      %1437 = vperm.xlu0 %1436, %v1433
      %v1438 = vpop.permute.xlu0 %1437
      %1441 = vset.pattern.permute.xlu0 0
      %1442 = vperm.xlu0 %1441, %v1434
      %v1443 = vpop.permute.xlu0 %1442
      %1449 = vrot.lane.b32.xlu0 %v1426, 1
      %v1450 = vpop.permute.xlu0 %1449
      %1451 = vrot.lane.b32.xlu0 %v1427, 1
      %v1452 = vpop.permute.xlu0 %1451
      %1453 = vrot.lane.b32.xlu0 %v1428, 1
      %v1454 = vpop.permute.xlu0 %1453
      %1455 = vrot.lane.b32.xlu0 %v1429, 1
      %v1456 = vpop.permute.xlu0 %1455
      %v1457 = vsel %vm1329, %v1450, %v1452
      %v1458 = vsel %vm1329, %v1454, %v1456
      %vm1461 = vcmask 130048
      %v1463 = vsel %vm1461, %v1430, 0
      %v1466 = vsel %vm1461, %v1431, 0
      %1468 = vmatprep.subr.mxu0 0.0
      %1469 = vmatpush1.msra.mxu0 0.0
      %1470 = vmatprep.subr.mxu0 0.0
      %1471 = vmatpush1.msra.mxu0 0.0
      %1472 = vmatprep.subr.mxu0 0.0
      %1473 = vmatpush1.msra.mxu0 0.0
      %1474 = vmatprep.subr.mxu0 0.0
      %1475 = vmatpush1.msra.mxu0 0.0
      %1476 = vmatprep.subr.mxu0 0.0
      %1477 = vmatpush1.msra.mxu0 0.0
      %1478 = vmatprep.subr.mxu0 0.0
      %1479 = vmatpush1.msra.mxu0 0.0
      %1480 = vmatprep.subr.mxu0 0.0
      %1481 = vmatpush1.msra.mxu0 0.0
      %1482 = vmatprep.subr.mxu0 0.0
      %1483 = vmatpush1.msra.mxu0 0.0
      %1484 = vmatprep.subr.mxu0 0.0
      %1485 = vmatpush1.msra.mxu0 0.0
      %1486 = vmatprep.subr.mxu0 0.0
      %1487 = vmatpush1.msra.mxu0 0.0
      %1488 = vmatprep.subr.mxu0 0.0
      %1489 = vmatpush1.msra.mxu0 0.0
      %1490 = vmatprep.subr.mxu0 0.0
      %1491 = vmatpush1.msra.mxu0 0.0
      %1492 = vmatprep.subr.mxu0 0.0
      %1493 = vmatpush1.msra.mxu0 0.0
      %1494 = vmatprep.subr.mxu0 0.0
      %1495 = vmatpush1.msra.mxu0 0.0
      %1496 = vmatprep.subr.mxu0 0.0
      %1497 = vmatpush1.msra.mxu0 %v1458
      %1498 = vmatprep.subr.mxu0 0.0
      %1499 = vmatpush1.msra.mxu0 %v1457
      %1500 = vmatprep.subr.mxu0 0.0
      %1501 = vmatpush2.msra.mxu0 0.0
      %1502 = vmatprep.subr.mxu0 0.0
      %1503 = vmatpush2.msra.mxu0 0.0
      %1504 = vmatprep.subr.mxu0 0.0
      %1505 = vmatpush2.msra.mxu0 0.0
      %1506 = vmatprep.subr.mxu0 0.0
      %1507 = vmatpush2.msra.mxu0 0.0
      %1508 = vmatprep.subr.mxu0 0.0
      %1509 = vmatpush2.msra.mxu0 0.0
      %1510 = vmatprep.subr.mxu0 0.0
      %1511 = vmatpush2.msra.mxu0 0.0
      %1512 = vmatprep.subr.mxu0 0.0
      %1513 = vmatpush2.msra.mxu0 0.0
      %1514 = vmatprep.subr.mxu0 0.0
      %1515 = vmatpush2.msra.mxu0 0.0
      %1516 = vmatprep.subr.mxu0 0.0
      %1517 = vmatpush2.msra.mxu0 0.0
      %1518 = vmatprep.subr.mxu0 0.0
      %1519 = vmatpush2.msra.mxu0 0.0
      %1520 = vmatprep.subr.mxu0 0.0
      %1521 = vmatpush2.msra.mxu0 0.0
      %1522 = vmatprep.subr.mxu0 0.0
      %1523 = vmatpush2.msra.mxu0 0.0
      %1524 = vmatprep.subr.mxu0 0.0
      %1525 = vmatpush2.msra.mxu0 0.0
      %1526 = vmatprep.subr.mxu0 0.0
      %1527 = vmatpush2.msra.mxu0 0.0
      %1528 = vmatprep.subr.mxu0 0.0
      %1529 = vmatpush2.msra.mxu0 0.0
      %1530 = vmatprep.subr.mxu0 0.0
      %1531 = vmatpush2.msra.mxu0 0.0
      %1532 = vmatprep.mubr.f32.mxu0 0.0
      %1533 = vmatmul.mubr.f32.gmra.mxu0 %v1463
      %v1534 = vpop.f32.mrf.mxu0
      %v1535 = vadd.f32 %v1438, %v1534
      %v1536 = vpop.f32.mrf.mxu0
      %1537 = vmatprep.mubr.f32.mxu0 0.0
      %1538 = vmatmul.mubr.f32.gmra.mxu0 %v1466
      %v1539 = vpop.f32.mrf.mxu0
      %v1540 = vadd.f32 %v1443, %v1539
      %v1541 = vpop.f32.mrf.mxu0
      %1542 = vdwg.mxu0
      %vm1543 = vcmp.gt.f32.partialorder %v1535, 0.0
      %vm1544 = vcmp.gt.f32.partialorder %v1540, 0.0
      %v1545 = vmin.f32 %v1535, 0.0
      %v1546 = vmin.f32 %v1540, 0.0
      %v1547 = vmul.f32 %v1545, 1.442695
      %v1548 = vpow.pop %v1547
      %v1549 = vmul.f32 %v1546, 1.442695
      %v1550 = vpow.pop %v1549
      %v1551 = vsub.f32 %v1548, 1.0
      %v1552 = vsub.f32 %v1550, 1.0
      %v1553 = vsel %vm1543, %v1535, %v1551
      %v1554 = vsel %vm1544, %v1540, %v1552
      %1555 = vadd.xlane.f32.xlu0 %v1553
      %v1556 = vpop.xlane.xlu0 %1555
      %1557 = vadd.xlane.f32.xlu0 %v1554
      %v1558 = vpop.xlane.xlu0 %1557
      %v1559 = vrcp.pop 128.0
      %v1560 = vmul.f32 %v1556, %v1559
      %v1561 = vmul.f32 %v1558, %v1559
      %1562 = vst.msk [vmem:[%s248] sm:$0xff] %vm1329, %v1560
      %1563 = vst.msk [vmem:[%s248 + $0x8] sm:$0xff] %vm1329, %v1561
      %p1564 = scmp.lt.s32.totalorder %s17, 1
      %s1565 = scalar_select %p1564, %s17, 1
      %s1566 = smul.addr %s1565, 2
      %s1567 = smul.addr %s1566, 8
      %s1568 = scalar_lea.vmem %s6, %s1567
      // Predicated region
      $region45: #{tpu_custom_call.1} parent=43 // pred_check
        %p1569 = pneg %p166
      $region46: #{tpu_custom_call.1} parent=43 // pred_check_branch
        %1571 = sbr.rel (%p1569) target = $region48
      $region47: #{tpu_custom_call.1} parent=43 // pred_region
        _
      $region48: #{tpu_custom_call.1} parent=43 // pred_fallthru
        _
    $region44: #{tpu_custom_call.1} parent=5 // pred_fallthru
      _
    %p1572 = scmp.le.s32.totalorder 2, %s12
    // Predicated region
    $region49: #{tpu_custom_call.1} parent=5 // pred_check
      %p1573 = pneg %p1572
    $region50: #{tpu_custom_call.1} parent=5 // pred_check_branch
      %1575 = sbr.rel (%p1573) target = $region52
    $region51: #{tpu_custom_call.1} parent=5 // pred_region
      %s1576 = ssub.s32 %s12, 2
      // Predicated region
      $region53: #{tpu_custom_call.1} parent=51 // pred_check
        %p1577 = pneg %p172
      $region54: #{tpu_custom_call.1} parent=51 // pred_check_branch
        %1579 = sbr.rel (%p1577) target = $region56
      $region55: #{tpu_custom_call.1} parent=51 // pred_region
        %p1580 = scmp.lt.s32.totalorder %s18, 1
        %s1581 = scalar_select %p1580, %s18, 1
        %s1582 = smul.addr %s1581, 2
        %s1583 = smul.addr %s1582, 8
        %s1584 = scalar_lea.vmem %s6, %s1583
      $region56: #{tpu_custom_call.1} parent=51 // pred_fallthru
        _
    $region52: #{tpu_custom_call.1} parent=5 // pred_fallthru
      _
  $region6: #{tpu_custom_call.1} parent=0 // loop_footer
    %s16 = sadd.s32 1, %s12
  $region7: #{tpu_custom_call.1} parent=0 // loop_footer_branch
    %11 = sbr.rel target = $region3
  $region8: #{tpu_custom_call.1} parent=0 // loop_exit
    _

</llo_original>
